<compile_context>
chip_gen: v6e
topology: v6e:2x2x1
jax: 0.10.0
libtpu: 0.0.40
codegen_flags: <defaults>
</compile_context>

<pallas_src>
import functools

import jax
import jax.numpy as jnp
from jax.experimental import pallas as pl
from jax.experimental.pallas import tpu as pltpu


def _mlp_kernel(x_ref, w1_ref, b1_ref, w2_ref, b2_ref, logits_ref):
    # hidden = relu(x @ W1 + b1)  (bf16 MXU operands, f32 accumulate/epilogue)
    h = jnp.dot(x_ref[...], w1_ref[...], preferred_element_type=jnp.float32)
    h = jnp.maximum(h + b1_ref[...], 0.0)        # b1 is [1, H] -> broadcast
    # logits = hidden @ W2 + b2
    o = jnp.dot(h.astype(jnp.bfloat16), w2_ref[...],
                preferred_element_type=jnp.float32)
    logits_ref[...] = (o + b2_ref[...]).astype(logits_ref.dtype)


@functools.partial(jax.jit, static_argnames=("tb", "single_buffer"))
def _mlp_pallas_call(x, w1, b1, w2, b2, *, tb, single_buffer):
    B, IN = x.shape
    H = w1.shape[1]
    O = w2.shape[1]
    assert B % tb == 0, "caller must pad B to a multiple of the batch tile"
    grid = (B // tb,)

    # Resident operands never change across the grid -> single buffer them
    # (halves their VMEM footprint; matters most on v7x's 64 MiB VMEM).
    res_kw = {"pipeline_mode": pl.Buffered(1)} if single_buffer else {}
    weight_bufs = 1 if single_buffer else 2

    # Explicit VMEM budget: double-buffered bf16 x/logits tiles + resident
    # weights/biases + the f32 [tb, H] intermediate (+2x headroom).
    vmem_bytes = (
        2 * tb * IN * 2                       # x tiles (bf16, double-buffered)
        + 2 * tb * O * 2                      # logits tiles (bf16)
        + weight_bufs * (IN * H + H * O) * 2  # bf16 weights
        + weight_bufs * (H + O) * 4           # f32 biases
        + tb * H * 4                          # f32 hidden intermediate
        + tb * O * 4                          # f32 pre-cast logits
    )
    vmem_limit = int(min(max(2 * vmem_bytes, 16 * 1024 * 1024),
                         64 * 1024 * 1024))

    return pl.pallas_call(
        _mlp_kernel,
        out_shape=jax.ShapeDtypeStruct((B, O), jnp.bfloat16),
        grid=grid,
        in_specs=[
            pl.BlockSpec((tb, IN), lambda i: (i, 0)),            # x tile
            pl.BlockSpec((IN, H), lambda i: (0, 0), **res_kw),   # W1 resident
            pl.BlockSpec((1, H), lambda i: (0, 0), **res_kw),    # b1
            pl.BlockSpec((H, O), lambda i: (0, 0), **res_kw),    # W2 resident
            pl.BlockSpec((1, O), lambda i: (0, 0), **res_kw),    # b2
        ],
        out_specs=pl.BlockSpec((tb, O), lambda i: (i, 0)),
        compiler_params=pltpu.CompilerParams(
            dimension_semantics=("parallel",),
            vmem_limit_bytes=vmem_limit,
        ),
    )(x, w1, b1, w2, b2)


def _choose_tb(B, block_b, min_steps=4):
    """Largest batch tile <= block_b that still gives the grid >= min_steps
    steps (so v7x's two TensorCores each get >=2 steps to pipeline)."""
    tb = max(8, min(block_b, B))
    while tb > 128 and pl.cdiv(B, tb) < min_steps:
        tb //= 2
    return tb


def mlp_forward_pallas(x, w1, b1, w2, b2, *, block_b=512):
    """Wrapped model's forward.  Returns a tuple whose first element is the
    logits; the hidden activation is never materialized to HBM because
    ModelWrapper discards everything but the first tuple element."""
    B = x.shape[0]
    x = x.astype(jnp.bfloat16)            # bf16 activation stream into HBM/DMA
    tb = _choose_tb(B, block_b)
    pad = (-B) % tb
    if pad:
        x = jnp.pad(x, ((0, pad), (0, 0)))

    try:
        logits = _mlp_pallas_call(x, w1, b1, w2, b2, tb=tb, single_buffer=True)
    except Exception:
        # pipeline_mode=pl.Buffered(1) not supported on this jax/Mosaic build;
        # fall back to default double-buffered resident operands.
        logits = _mlp_pallas_call(x, w1, b1, w2, b2, tb=tb, single_buffer=False)

    if pad:
        logits = logits[:B]
    return (logits,)


def model_wrapper_forward(x, params):
    """Equivalent of ModelWrapper.forward: run the wrapped model and take the
    first element if the output is a tuple/list."""
    lo = mlp_forward_pallas(x, *params)
    if isinstance(lo, (tuple, list)):
        lo = lo[0]
    return lo


def init_params(key, in_features, hidden, out_features):
    k1, k2, k3, k4 = jax.random.split(key, 4)
    # Weights in bf16 (MXU operands); biases in f32 (VPU epilogue, v5e-safe).
    w1 = (jax.random.normal(k1, (in_features, hidden), jnp.float32) * 0.1
          ).astype(jnp.bfloat16)
    b1 = jax.random.normal(k2, (1, hidden), jnp.float32) * 0.1
    w2 = (jax.random.normal(k3, (hidden, out_features), jnp.float32) * 0.1
          ).astype(jnp.bfloat16)
    b2 = jax.random.normal(k4, (1, out_features), jnp.float32) * 0.1
    return w1, b1, w2, b2


if __name__ == "__main__":
    key = jax.random.PRNGKey(0)
    kx, kp = jax.random.split(key)

    # Feature dims of 256 fully fill the 256-wide MXUs of v6e/v7x; B=512 with
    # a 128-row batch tile gives grid=(4,) -> 2 pipelined steps per TC on v7x.
    B, IN, HID, OUT = 512, 256, 256, 256
    x = jax.random.normal(kx, (B, IN), jnp.float32).astype(jnp.bfloat16)
    params = init_params(kp, IN, HID, OUT)

    out = model_wrapper_forward(x, params)
    out = jax.block_until_ready(out)

    # Pure-JAX reference with the identical bf16-matmul / f32-accumulate /
    # bf16-output recipe.
    w1, b1, w2, b2 = params
    h_ref = jnp.maximum(
        jnp.dot(x, w1, preferred_element_type=jnp.float32) + b1, 0.0)
    ref = (jnp.dot(h_ref.astype(jnp.bfloat16), w2,
                   preferred_element_type=jnp.float32) + b2
           ).astype(jnp.bfloat16)

    assert out.shape == (B, OUT)
    assert out.dtype == jnp.bfloat16
    err = float(jnp.max(jnp.abs(out.astype(jnp.float32)
                                - ref.astype(jnp.float32))))
    assert jnp.allclose(out.astype(jnp.float32), ref.astype(jnp.float32),
                        atol=5e-2, rtol=5e-2), err

    print("KERNEL_OK")
</pallas_src>

<mosaic_0001>
module attributes {stable_mosaic.version = 11 : i64} {
  func.func @_mlp_kernel(%arg0: i32, %arg1: memref<128x256xbf16, #tpu.memory_space<vmem>>, %arg2: memref<256x256xbf16, #tpu.memory_space<vmem>>, %arg3: memref<1x256xf32, #tpu.memory_space<vmem>>, %arg4: memref<256x256xbf16, #tpu.memory_space<vmem>>, %arg5: memref<1x256xf32, #tpu.memory_space<vmem>>, %arg6: memref<128x256xbf16, #tpu.memory_space<vmem>>) attributes {dimension_semantics = [#tpu.dimension_semantics<parallel>], iteration_bounds = array<i64: 4>, scalar_prefetch = 0 : i64, scratch_operands = 0 : i64, tpu.core_type = #tpu.core_type<tc>, window_params = [{transform_indices = @transform_0, window_bounds = array<i64: 128, 256>}, {pipeline_mode = #tpu.pipeline_mode<synchronous>, transform_indices = @transform_1, window_bounds = array<i64: 256, 256>}, {pipeline_mode = #tpu.pipeline_mode<synchronous>, transform_indices = @transform_2, window_bounds = array<i64: 1, 256>}, {pipeline_mode = #tpu.pipeline_mode<synchronous>, transform_indices = @transform_3, window_bounds = array<i64: 256, 256>}, {pipeline_mode = #tpu.pipeline_mode<synchronous>, transform_indices = @transform_4, window_bounds = array<i64: 1, 256>}, {transform_indices = @transform_5, window_bounds = array<i64: 128, 256>}]} {
    %c0 = arith.constant 0 : index
    %c0_0 = arith.constant 0 : index
    %0 = vector.load %arg1[%c0, %c0_0] : memref<128x256xbf16, #tpu.memory_space<vmem>>, vector<128x256xbf16>
    %c0_1 = arith.constant 0 : index
    %c0_2 = arith.constant 0 : index
    %1 = vector.load %arg2[%c0_1, %c0_2] : memref<256x256xbf16, #tpu.memory_space<vmem>>, vector<256x256xbf16>
    %cst = arith.constant dense<0.000000e+00> : vector<128x256xf32>
    %2 = tpu.matmul %0, %1, %cst {dimension_numbers = #tpu.dot_dimension_numbers<[1], [0], [0], [1], [0, 0, 1, 1], [], []>} : vector<128x256xbf16>, vector<256x256xbf16>, vector<128x256xf32> -> vector<128x256xf32>
    %c0_3 = arith.constant 0 : index
    %c0_4 = arith.constant 0 : index
    %3 = vector.load %arg3[%c0_3, %c0_4] : memref<1x256xf32, #tpu.memory_space<vmem>>, vector<1x256xf32>
    %4 = vector.broadcast %3 : vector<1x256xf32> to vector<128x256xf32>
    %5 = arith.addf %2, %4 : vector<128x256xf32>
    %cst_5 = arith.constant 0.000000e+00 : f32
    %6 = vector.broadcast %cst_5 : f32 to vector<128x256xf32>
    %7 = arith.maximumf %5, %6 : vector<128x256xf32>
    %8 = arith.truncf %7 : vector<128x256xf32> to vector<128x256xbf16>
    %c0_6 = arith.constant 0 : index
    %c0_7 = arith.constant 0 : index
    %9 = vector.load %arg4[%c0_6, %c0_7] : memref<256x256xbf16, #tpu.memory_space<vmem>>, vector<256x256xbf16>
    %cst_8 = arith.constant dense<0.000000e+00> : vector<128x256xf32>
    %10 = tpu.matmul %8, %9, %cst_8 {dimension_numbers = #tpu.dot_dimension_numbers<[1], [0], [0], [1], [0, 0, 1, 1], [], []>} : vector<128x256xbf16>, vector<256x256xbf16>, vector<128x256xf32> -> vector<128x256xf32>
    %c0_9 = arith.constant 0 : index
    %c0_10 = arith.constant 0 : index
    %11 = vector.load %arg5[%c0_9, %c0_10] : memref<1x256xf32, #tpu.memory_space<vmem>>, vector<1x256xf32>
    %12 = vector.broadcast %11 : vector<1x256xf32> to vector<128x256xf32>
    %13 = arith.addf %10, %12 : vector<128x256xf32>
    %14 = arith.truncf %13 : vector<128x256xf32> to vector<128x256xbf16>
    %c0_11 = arith.constant 0 : index
    %c0_12 = arith.constant 0 : index
    %15 = vector.load %arg6[%c0_11, %c0_12] : memref<128x256xbf16, #tpu.memory_space<vmem>>, vector<128x256xbf16>
    tpu.vector_store %arg6[%c0_11, %c0_12], %14 {strides = array<i32>} : memref<128x256xbf16, #tpu.memory_space<vmem>>, vector<128x256xbf16>,
    return
  }
  func.func @transform_0(%arg0: i32) -> (i32, i32) {
    %c0_i32 = arith.constant 0 : i32
    %c0_i32_0 = arith.constant 0 : i32
    return %arg0, %c0_i32 : i32, i32
  }
  func.func @transform_1(%arg0: i32) -> (i32, i32) {
    %c0_i32 = arith.constant 0 : i32
    %c0_i32_0 = arith.constant 0 : i32
    %c0_i32_1 = arith.constant 0 : i32
    return %c0_i32, %c0_i32_0 : i32, i32
  }
  func.func @transform_2(%arg0: i32) -> (i32, i32) {
    %c0_i32 = arith.constant 0 : i32
    %c0_i32_0 = arith.constant 0 : i32
    %c0_i32_1 = arith.constant 0 : i32
    return %c0_i32, %c0_i32_0 : i32, i32
  }
  func.func @transform_3(%arg0: i32) -> (i32, i32) {
    %c0_i32 = arith.constant 0 : i32
    %c0_i32_0 = arith.constant 0 : i32
    %c0_i32_1 = arith.constant 0 : i32
    return %c0_i32, %c0_i32_0 : i32, i32
  }
  func.func @transform_4(%arg0: i32) -> (i32, i32) {
    %c0_i32 = arith.constant 0 : i32
    %c0_i32_0 = arith.constant 0 : i32
    %c0_i32_1 = arith.constant 0 : i32
    return %c0_i32, %c0_i32_0 : i32, i32
  }
  func.func @transform_5(%arg0: i32) -> (i32, i32) {
    %c0_i32 = arith.constant 0 : i32
    %c0_i32_0 = arith.constant 0 : i32
    return %arg0, %c0_i32 : i32, i32
  }
}

module attributes {stable_mosaic.version = 11 : i64} {
  func.func @_mlp_kernel(%arg0: i32, %arg1: memref<128x256xbf16, #tpu.memory_space<vmem>>, %arg2: memref<256x256xbf16, #tpu.memory_space<vmem>>, %arg3: memref<1x256xf32, #tpu.memory_space<vmem>>, %arg4: memref<256x256xbf16, #tpu.memory_space<vmem>>, %arg5: memref<1x256xf32, #tpu.memory_space<vmem>>, %arg6: memref<128x256xbf16, #tpu.memory_space<vmem>>) attributes {dimension_semantics = [#tpu.dimension_semantics<parallel>], iteration_bounds = array<i64: 4>, scalar_prefetch = 0 : i64, scratch_operands = 0 : i64, tpu.core_type = #tpu.core_type<tc>, window_params = [{transform_indices = @transform_0, window_bounds = array<i64: 128, 256>}, {pipeline_mode = #tpu.pipeline_mode<synchronous>, transform_indices = @transform_1, window_bounds = array<i64: 256, 256>}, {pipeline_mode = #tpu.pipeline_mode<synchronous>, transform_indices = @transform_2, window_bounds = array<i64: 1, 256>}, {pipeline_mode = #tpu.pipeline_mode<synchronous>, transform_indices = @transform_3, window_bounds = array<i64: 256, 256>}, {pipeline_mode = #tpu.pipeline_mode<synchronous>, transform_indices = @transform_4, window_bounds = array<i64: 1, 256>}, {transform_indices = @transform_5, window_bounds = array<i64: 128, 256>}]} {
    %c0 = arith.constant 0 : index
    %c0_0 = arith.constant 0 : index
    %0 = vector.load %arg1[%c0, %c0_0] : memref<128x256xbf16, #tpu.memory_space<vmem>>, vector<128x256xbf16>
    %c0_1 = arith.constant 0 : index
    %c0_2 = arith.constant 0 : index
    %1 = vector.load %arg2[%c0_1, %c0_2] : memref<256x256xbf16, #tpu.memory_space<vmem>>, vector<256x256xbf16>
    %cst = arith.constant dense<0.000000e+00> : vector<128x256xf32>
    %2 = tpu.matmul %0, %1, %cst {dimension_numbers = #tpu.dot_dimension_numbers<[1], [0], [0], [1], [0, 0, 1, 1], [], []>} : vector<128x256xbf16>, vector<256x256xbf16>, vector<128x256xf32> -> vector<128x256xf32>
    %c0_3 = arith.constant 0 : index
    %c0_4 = arith.constant 0 : index
    %3 = vector.load %arg3[%c0_3, %c0_4] : memref<1x256xf32, #tpu.memory_space<vmem>>, vector<1x256xf32>
    %4 = vector.broadcast %3 : vector<1x256xf32> to vector<128x256xf32>
    %5 = arith.addf %2, %4 : vector<128x256xf32>
    %cst_5 = arith.constant 0.000000e+00 : f32
    %6 = vector.broadcast %cst_5 : f32 to vector<128x256xf32>
    %7 = arith.maximumf %5, %6 : vector<128x256xf32>
    %8 = arith.truncf %7 : vector<128x256xf32> to vector<128x256xbf16>
    %c0_6 = arith.constant 0 : index
    %c0_7 = arith.constant 0 : index
    %9 = vector.load %arg4[%c0_6, %c0_7] : memref<256x256xbf16, #tpu.memory_space<vmem>>, vector<256x256xbf16>
    %cst_8 = arith.constant dense<0.000000e+00> : vector<128x256xf32>
    %10 = tpu.matmul %8, %9, %cst_8 {dimension_numbers = #tpu.dot_dimension_numbers<[1], [0], [0], [1], [0, 0, 1, 1], [], []>} : vector<128x256xbf16>, vector<256x256xbf16>, vector<128x256xf32> -> vector<128x256xf32>
    %c0_9 = arith.constant 0 : index
    %c0_10 = arith.constant 0 : index
    %11 = vector.load %arg5[%c0_9, %c0_10] : memref<1x256xf32, #tpu.memory_space<vmem>>, vector<1x256xf32>
    %12 = vector.broadcast %11 : vector<1x256xf32> to vector<128x256xf32>
    %13 = arith.addf %10, %12 : vector<128x256xf32>
    %14 = arith.truncf %13 : vector<128x256xf32> to vector<128x256xbf16>
    %c0_11 = arith.constant 0 : index
    %c0_12 = arith.constant 0 : index
    %15 = vector.load %arg6[%c0_11, %c0_12] : memref<128x256xbf16, #tpu.memory_space<vmem>>, vector<128x256xbf16>
    tpu.vector_store %arg6[%c0_11, %c0_12], %14 {strides = array<i32>} : memref<128x256xbf16, #tpu.memory_space<vmem>>, vector<128x256xbf16>,
    return
  }
  func.func @transform_0(%arg0: i32) -> (i32, i32) {
    %c0_i32 = arith.constant 0 : i32
    %c0_i32_0 = arith.constant 0 : i32
    return %arg0, %c0_i32 : i32, i32
  }
  func.func @transform_1(%arg0: i32) -> (i32, i32) {
    %c0_i32 = arith.constant 0 : i32
    %c0_i32_0 = arith.constant 0 : i32
    %c0_i32_1 = arith.constant 0 : i32
    return %c0_i32, %c0_i32_0 : i32, i32
  }
  func.func @transform_2(%arg0: i32) -> (i32, i32) {
    %c0_i32 = arith.constant 0 : i32
    %c0_i32_0 = arith.constant 0 : i32
    %c0_i32_1 = arith.constant 0 : i32
    return %c0_i32, %c0_i32_0 : i32, i32
  }
  func.func @transform_3(%arg0: i32) -> (i32, i32) {
    %c0_i32 = arith.constant 0 : i32
    %c0_i32_0 = arith.constant 0 : i32
    %c0_i32_1 = arith.constant 0 : i32
    return %c0_i32, %c0_i32_0 : i32, i32
  }
  func.func @transform_4(%arg0: i32) -> (i32, i32) {
    %c0_i32 = arith.constant 0 : i32
    %c0_i32_0 = arith.constant 0 : i32
    %c0_i32_1 = arith.constant 0 : i32
    return %c0_i32, %c0_i32_0 : i32, i32
  }
  func.func @transform_5(%arg0: i32) -> (i32, i32) {
    %c0_i32 = arith.constant 0 : i32
    %c0_i32_0 = arith.constant 0 : i32
    return %arg0, %c0_i32 : i32, i32
  }
}

</mosaic_0001>

<llo_original>
// kernel: _mlp_pallas_call.1
$region0: #{_mlp_pallas_call.1}
  #allocation0 [shape = 'u32[]', space=smem, size = 0x4, offset = 0x4, fixed_abs, tag = 'smem constant byte address 0x4 - core index']
  #allocation1 [shape = 'u32[144,128]{1,0:T(1,128)}', space=vmem, size = 0x12000, scoped, tag = 'internal scratch']
  %s0 = inlined_call_operand.hbm [shape: bf16[512,256], index: 0, kind: input, shape index: {}]
  %s1 = inlined_call_operand.hbm [shape: bf16[256,256], index: 1, kind: input, shape index: {}]
  %s2 = inlined_call_operand.vmem [shape: f32[1,256], index: 2, kind: input, shape index: {}]
  %s3 = inlined_call_operand.hbm [shape: bf16[256,256], index: 3, kind: input, shape index: {}]
  %s4 = inlined_call_operand.vmem [shape: f32[1,256], index: 4, kind: input, shape index: {}]
  %s5 = inlined_call_operand.hbm [shape: bf16[512,256], index: 5, kind: output, shape index: {}]
  %s6 = sld [smem:[#allocation0]]
  $region65: #{_mlp_pallas_call.1} parent=0
    _
  %s8 = ssub.s32 1, %s6
  %s9 = scalar_select 0, %s8, %s6
  $region1: #{_mlp_pallas_call.1} parent=0
    #allocation2 [shape = 'u8[131072]{0}', space=vmem, size = 0x20000, scoped, tag = 'input window, operand 0']
    #allocation3 [shape = 's32[2]{0}', space=sflag, size = 0x8, scoped, tag = 'scoped memory for _mlp_pallas_call.1']
    #allocation4 [shape = 's32[2]{0}', space=sflag, size = 0x8, scoped, tag = 'scoped memory for _mlp_pallas_call.1']
    #allocation5 [shape = 'u8[131072]{0}', space=vmem, size = 0x20000, scoped, tag = 'input window, operand 1, single buffered']
    #allocation6 [shape = 's32[1]{0}', space=sflag, size = 0x4, scoped, tag = 'scoped memory for _mlp_pallas_call.1']
    #allocation7 [shape = 'u8[131072]{0}', space=vmem, size = 0x20000, scoped, tag = 'input window, operand 3, single buffered']
    #allocation8 [shape = 'u8[131072]{0}', space=vmem, size = 0x20000, scoped, tag = 'output window, operand 0']
    %10 = vsyncpa [#allocation3], 0
    %s11 = scalar_lea.sflag [#allocation3], 1
    %12 = vsyncpa %s11, 0
    %13 = vsyncpa [#allocation6], 0
    %14 = vsyncpa [#allocation4], 0
    %s15 = scalar_lea.sflag [#allocation4], 1
    %16 = vsyncpa %s15, 0
    loop: start=0, step=1, limit=6
    $region2: #{_mlp_pallas_call.1} parent=1 // loop_pre_header
      _
    $region3: #{_mlp_pallas_call.1} parent=1 // loop_header
      %s18 = sphi 0, %s22
      %p19 = scmp.ge.s32.totalorder %s18, 6
      %s28 = sphi 0, %s30
      %s31 = sphi 0, %s28
      %s32 = sphi 0, %s31
      %s48 = sphi 0, %s32
      %s52 = sphi 0, %s52
      %s54 = sphi 0, %s52
      %s55 = sphi 0, %s54
      %s69 = sphi 0, %s55
      %s73 = sphi 0, %s73
      %s75 = sphi 0, %s73
      %s76 = sphi 0, %s75
      %s90 = sphi 0, %s76
      %s94 = sphi 0, %s94
      %s96 = sphi 0, %s94
      %s97 = sphi 0, %s96
      %s111 = sphi 0, %s97
      %s115 = sphi 0, %s115
      %s117 = sphi 0, %s115
      %s118 = sphi 0, %s117
      %s132 = sphi 0, %s118
      %s138 = sphi 0, %s140
      %s141 = sphi 0, %s138
      %s142 = sphi 0, %s141
      %s158 = sphi 0, %s142
    $region4: #{_mlp_pallas_call.1} parent=1 // loop_header_branch
      %21 = sbr.rel (%p19) target = $region8
    $region5: #{_mlp_pallas_call.1} parent=1 // loop_body
      %s23 = ssub.s32 %s18, 1
      %s24 = ssub.s32 %s18, 2
      %s25 = sadd.s32 %s18, 1
      %s26 = ssub.s32 %s18, %s25
      %p27 = scmp.eq.s32.totalorder %s26, 0
      %s29 = sadd.s32 %s28, 1
      %s30 = scalar_select %p27, %s28, %s29
      %p33 = pneg %p27
      %p34 = scmp.eq.s32.totalorder %s18, 3
      %p35 = por %p33, %p34
      %p36 = scmp.ne.s32.totalorder %s28, %s31
      %p37 = scmp.eq.s32.totalorder %s18, 0
      %p38 = por %p36, %p37
      %p39 = scmp.ne.s32.totalorder %s28, %s31
      %p40 = scmp.eq.s32.totalorder %s23, 3
      %p41 = por %p39, %p40
      %p42 = scmp.ne.s32.totalorder %s31, %s32
      %p43 = scmp.eq.s32.totalorder %s23, 0
      %p44 = por %p42, %p43
      %p45 = scmp.ne.s32.totalorder %s31, %s32
      %p46 = scmp.eq.s32.totalorder %s24, 3
      %p47 = por %p45, %p46
      %p49 = scmp.ne.s32.totalorder %s32, %s48
      %p50 = scmp.eq.s32.totalorder %s24, 0
      %p51 = por %p49, %p50
      %s53 = sadd.s32 %s52, 1
      %p56 = scmp.eq.s32.totalorder %s18, 3
      %p57 = scmp.ne.s32.totalorder %s52, %s54
      %p58 = scmp.eq.s32.totalorder %s18, 0
      %p59 = por %p57, %p58
      %p60 = scmp.ne.s32.totalorder %s52, %s54
      %p61 = scmp.eq.s32.totalorder %s23, 3
      %p62 = por %p60, %p61
      %p63 = scmp.ne.s32.totalorder %s54, %s55
      %p64 = scmp.eq.s32.totalorder %s23, 0
      %p65 = por %p63, %p64
      %p66 = scmp.ne.s32.totalorder %s54, %s55
      %p67 = scmp.eq.s32.totalorder %s24, 3
      %p68 = por %p66, %p67
      %p70 = scmp.ne.s32.totalorder %s55, %s69
      %p71 = scmp.eq.s32.totalorder %s24, 0
      %p72 = por %p70, %p71
      %s74 = sadd.s32 %s73, 1
      %p77 = scmp.eq.s32.totalorder %s18, 3
      %p78 = scmp.ne.s32.totalorder %s73, %s75
      %p79 = scmp.eq.s32.totalorder %s18, 0
      %p80 = por %p78, %p79
      %p81 = scmp.ne.s32.totalorder %s73, %s75
      %p82 = scmp.eq.s32.totalorder %s23, 3
      %p83 = por %p81, %p82
      %p84 = scmp.ne.s32.totalorder %s75, %s76
      %p85 = scmp.eq.s32.totalorder %s23, 0
      %p86 = por %p84, %p85
      %p87 = scmp.ne.s32.totalorder %s75, %s76
      %p88 = scmp.eq.s32.totalorder %s24, 3
      %p89 = por %p87, %p88
      %p91 = scmp.ne.s32.totalorder %s76, %s90
      %p92 = scmp.eq.s32.totalorder %s24, 0
      %p93 = por %p91, %p92
      %s95 = sadd.s32 %s94, 1
      %p98 = scmp.eq.s32.totalorder %s18, 3
      %p99 = scmp.ne.s32.totalorder %s94, %s96
      %p100 = scmp.eq.s32.totalorder %s18, 0
      %p101 = por %p99, %p100
      %p102 = scmp.ne.s32.totalorder %s94, %s96
      %p103 = scmp.eq.s32.totalorder %s23, 3
      %p104 = por %p102, %p103
      %p105 = scmp.ne.s32.totalorder %s96, %s97
      %p106 = scmp.eq.s32.totalorder %s23, 0
      %p107 = por %p105, %p106
      %p108 = scmp.ne.s32.totalorder %s96, %s97
      %p109 = scmp.eq.s32.totalorder %s24, 3
      %p110 = por %p108, %p109
      %p112 = scmp.ne.s32.totalorder %s97, %s111
      %p113 = scmp.eq.s32.totalorder %s24, 0
      %p114 = por %p112, %p113
      %s116 = sadd.s32 %s115, 1
      %p119 = scmp.eq.s32.totalorder %s18, 3
      %p120 = scmp.ne.s32.totalorder %s115, %s117
      %p121 = scmp.eq.s32.totalorder %s18, 0
      %p122 = por %p120, %p121
      %p123 = scmp.ne.s32.totalorder %s115, %s117
      %p124 = scmp.eq.s32.totalorder %s23, 3
      %p125 = por %p123, %p124
      %p126 = scmp.ne.s32.totalorder %s117, %s118
      %p127 = scmp.eq.s32.totalorder %s23, 0
      %p128 = por %p126, %p127
      %p129 = scmp.ne.s32.totalorder %s117, %s118
      %p130 = scmp.eq.s32.totalorder %s24, 3
      %p131 = por %p129, %p130
      %p133 = scmp.ne.s32.totalorder %s118, %s132
      %p134 = scmp.eq.s32.totalorder %s24, 0
      %p135 = por %p133, %p134
      %s136 = ssub.s32 %s18, %s25
      %p137 = scmp.eq.s32.totalorder %s136, 0
      %s139 = sadd.s32 %s138, 1
      %s140 = scalar_select %p137, %s138, %s139
      %p143 = pneg %p137
      %p144 = scmp.eq.s32.totalorder %s18, 3
      %p145 = por %p143, %p144
      %p146 = scmp.ne.s32.totalorder %s138, %s141
      %p147 = scmp.eq.s32.totalorder %s18, 0
      %p148 = por %p146, %p147
      %p149 = scmp.ne.s32.totalorder %s138, %s141
      %p150 = scmp.eq.s32.totalorder %s23, 3
      %p151 = por %p149, %p150
      %p152 = scmp.ne.s32.totalorder %s141, %s142
      %p153 = scmp.eq.s32.totalorder %s23, 0
      %p154 = por %p152, %p153
      %p155 = scmp.ne.s32.totalorder %s141, %s142
      %p156 = scmp.eq.s32.totalorder %s24, 3
      %p157 = por %p155, %p156
      %p159 = scmp.ne.s32.totalorder %s142, %s158
      %p160 = scmp.eq.s32.totalorder %s24, 0
      %p161 = por %p159, %p160
      %p162 = scmp.le.s32.totalorder 1, %s18
      %p163 = scmp.lt.s32.totalorder %s18, 5
      %p164 = pnand %p162, %p163
      %p165 = pneg %p164
      // Predicated region
      $region9: #{_mlp_pallas_call.1} parent=5 // pred_check
        _
      $region10: #{_mlp_pallas_call.1} parent=5 // pred_check_branch
        %167 = sbr.rel (%p164) target = $region12
      $region11: #{_mlp_pallas_call.1} parent=5 // pred_region
        %s168 = ssub.s32 %s18, 1
        // Predicated region
        $region13: #{_mlp_pallas_call.1} parent=11 // pred_check
          %p169 = pneg %p65
        $region14: #{_mlp_pallas_call.1} parent=11 // pred_check_branch
          %171 = sbr.rel (%p169) target = $region16
        $region15: #{_mlp_pallas_call.1} parent=11 // pred_region
          %s173 = ssub.s32 4096, 4096
          %174 = vsyncadd [#allocation6], %s173
          %s175 = sshll.u32 [#allocation5], 4
          %s176 = int_to_ptr.vmem [resolvable:$true] %s175
          %181 = dma.hbm_to_vmem [thread:$0]  %s1, 4096, %s176, [#allocation6], 128, 128, 8
        $region16: #{_mlp_pallas_call.1} parent=11 // pred_fallthru
          _
        // Predicated region
        $region17: #{_mlp_pallas_call.1} parent=11 // pred_check
          %p182 = pneg %p86
        $region18: #{_mlp_pallas_call.1} parent=11 // pred_check_branch
          %184 = sbr.rel (%p182) target = $region20
        $region19: #{_mlp_pallas_call.1} parent=11 // pred_region
          _
        $region20: #{_mlp_pallas_call.1} parent=11 // pred_fallthru
          _
        // Predicated region
        $region21: #{_mlp_pallas_call.1} parent=11 // pred_check
          %p185 = pneg %p107
        $region22: #{_mlp_pallas_call.1} parent=11 // pred_check_branch
          %187 = sbr.rel (%p185) target = $region24
        $region23: #{_mlp_pallas_call.1} parent=11 // pred_region
          %s189 = ssub.s32 4096, 4096
          %190 = vsyncadd [#allocation6], %s189
          %s191 = sshll.u32 [#allocation7], 4
          %s192 = int_to_ptr.vmem [resolvable:$true] %s191
          %197 = dma.hbm_to_vmem [thread:$0]  %s3, 4096, %s192, [#allocation6], 128, 128, 8
        $region24: #{_mlp_pallas_call.1} parent=11 // pred_fallthru
          _
        // Predicated region
        $region25: #{_mlp_pallas_call.1} parent=11 // pred_check
          %p198 = pneg %p128
        $region26: #{_mlp_pallas_call.1} parent=11 // pred_check_branch
          %200 = sbr.rel (%p198) target = $region28
        $region27: #{_mlp_pallas_call.1} parent=11 // pred_region
          _
        $region28: #{_mlp_pallas_call.1} parent=11 // pred_fallthru
          _
      $region12: #{_mlp_pallas_call.1} parent=5 // pred_fallthru
        _
      %p201 = scmp.lt.s32.totalorder %s18, 4
      // Predicated region
      $region29: #{_mlp_pallas_call.1} parent=5 // pred_check
        %p202 = pneg %p201
      $region30: #{_mlp_pallas_call.1} parent=5 // pred_check_branch
        %204 = sbr.rel (%p202) target = $region32
      $region31: #{_mlp_pallas_call.1} parent=5 // pred_region
        // Predicated region
        $region33: #{_mlp_pallas_call.1} parent=31 // pred_check
          %p205 = pneg %p38
        $region34: #{_mlp_pallas_call.1} parent=31 // pred_check_branch
          %207 = sbr.rel (%p205) target = $region36
        $region35: #{_mlp_pallas_call.1} parent=31 // pred_region
          %s208 = sand.u32 %s28, 1
          %s209 = scalar_lea.sflag [#allocation3], %s208
          %s210 = sand.u32 %s28, 1
          %s211 = smul.addr %s210, 128
          %s212 = scalar_lea.vmem [#allocation2], %s211
          %s213 = smul.u32 16, %s18
          %s215 = ssub.s32 2048, 2048
          %216 = vsyncadd %s209, %s215
          %s217 = smul.addr %s213, 2
          %s218 = smul.addr %s217, 64
          %s219 = scalar_lea.hbm %s0, %s218
          %s220 = sshll.u32 %s212, 4
          %s221 = int_to_ptr.vmem [resolvable:$true] %s220
          %226 = dma.hbm_to_vmem [thread:$0]  %s219, 2048, %s221, %s209, 128, 128, 8
        $region36: #{_mlp_pallas_call.1} parent=31 // pred_fallthru
          _
      $region32: #{_mlp_pallas_call.1} parent=5 // pred_fallthru
        _
      %p227 = scmp.le.s32.totalorder 1, %s18
      %p228 = scmp.lt.s32.totalorder %s18, 5
      %p229 = pnand %p227, %p228
      %p230 = pneg %p229
      // Predicated region
      $region37: #{_mlp_pallas_call.1} parent=5 // pred_check
        _
      $region38: #{_mlp_pallas_call.1} parent=5 // pred_check_branch
        %232 = sbr.rel (%p229) target = $region40
      $region39: #{_mlp_pallas_call.1} parent=5 // pred_region
        %s233 = ssub.s32 %s18, 1
        %s234 = sand.u32 %s31, 1
        %s235 = scalar_lea.sflag [#allocation3], %s234
        %s236 = sand.u32 %s31, 1
        %s237 = smul.addr %s236, 128
        %s238 = scalar_lea.vmem [#allocation2], %s237
        // Predicated region
        $region41: #{_mlp_pallas_call.1} parent=39 // pred_check
          %p239 = pneg %p44
        $region42: #{_mlp_pallas_call.1} parent=39 // pred_check_branch
          %241 = sbr.rel (%p239) target = $region44
        $region43: #{_mlp_pallas_call.1} parent=39 // pred_region
          %242 = dma.done %s235, 2048
        $region44: #{_mlp_pallas_call.1} parent=39 // pred_fallthru
          _
        // Predicated region
        $region45: #{_mlp_pallas_call.1} parent=39 // pred_check
          %p243 = pneg %p65
        $region46: #{_mlp_pallas_call.1} parent=39 // pred_check_branch
          %245 = sbr.rel (%p243) target = $region48
        $region47: #{_mlp_pallas_call.1} parent=39 // pred_region
          %246 = dma.done [#allocation6], 4096
        $region48: #{_mlp_pallas_call.1} parent=39 // pred_fallthru
          _
        // Predicated region
        $region49: #{_mlp_pallas_call.1} parent=39 // pred_check
          %p247 = pneg %p107
        $region50: #{_mlp_pallas_call.1} parent=39 // pred_check_branch
          %249 = sbr.rel (%p247) target = $region52
        $region51: #{_mlp_pallas_call.1} parent=39 // pred_region
          %250 = dma.done [#allocation6], 4096
        $region52: #{_mlp_pallas_call.1} parent=39 // pred_fallthru
          _
        %s251 = sand.u32 %s31, 1
        %s252 = scalar_lea.sflag [#allocation3], %s251
        %s253 = sand.u32 %s31, 1
        %s254 = smul.addr %s253, 128
        %s255 = scalar_lea.vmem [#allocation2], %s254
        %p256 = pneg %p44
        %p257 = pneg %p41
        %p258 = pneg %p65
        %p259 = pneg %p62
        %p260 = pneg %p86
        %p261 = pneg %p83
        %p262 = pneg %p107
        %p263 = pneg %p104
        %p264 = pneg %p128
        %p265 = pneg %p125
        %p266 = pneg %p154
        %p267 = pneg %p151
        %s268 = sand.u32 %s141, 1
        %s269 = scalar_lea.sflag [#allocation4], %s268
        %s270 = sand.u32 %s141, 1
        %s271 = smul.addr %s270, 128
        %s272 = scalar_lea.vmem [#allocation8], %s271
        %s273 = smul.u32 16, %s23
        %s274 = smul.u32 16, %s23
        %v275 = vld [vmem:[%s238] sm:$0xff]
        %v276 = vld [vmem:[%s238 + $0x8] sm:$0xff]
        %v277 = vld [vmem:[%s238 + $0x10] sm:$0xff]
        %v278 = vld [vmem:[%s238 + $0x18] sm:$0xff]
        %v279 = vld [vmem:[%s238 + $0x20] sm:$0xff]
        %v280 = vld [vmem:[%s238 + $0x28] sm:$0xff]
        %v281 = vld [vmem:[%s238 + $0x30] sm:$0xff]
        %v282 = vld [vmem:[%s238 + $0x38] sm:$0xff]
        %v283 = vld [vmem:[%s238 + $0x40] sm:$0xff]
        %v284 = vld [vmem:[%s238 + $0x48] sm:$0xff]
        %v285 = vld [vmem:[%s238 + $0x50] sm:$0xff]
        %v286 = vld [vmem:[%s238 + $0x58] sm:$0xff]
        %v287 = vld [vmem:[%s238 + $0x60] sm:$0xff]
        %v288 = vld [vmem:[%s238 + $0x68] sm:$0xff]
        %v289 = vld [vmem:[%s238 + $0x70] sm:$0xff]
        %v290 = vld [vmem:[%s238 + $0x78] sm:$0xff]
        %v291 = vld [vmem:[#allocation5] sm:$0xff]
        %v292 = vld [vmem:[#allocation5 + $0x8] sm:$0xff]
        %v293 = vld [vmem:[#allocation5 + $0x10] sm:$0xff]
        %v294 = vld [vmem:[#allocation5 + $0x18] sm:$0xff]
        %v295 = vld [vmem:[#allocation5 + $0x20] sm:$0xff]
        %v296 = vld [vmem:[#allocation5 + $0x28] sm:$0xff]
        %v297 = vld [vmem:[#allocation5 + $0x30] sm:$0xff]
        %v298 = vld [vmem:[#allocation5 + $0x38] sm:$0xff]
        %v299 = vld [vmem:[#allocation5 + $0x40] sm:$0xff]
        %v300 = vld [vmem:[#allocation5 + $0x48] sm:$0xff]
        %v301 = vld [vmem:[#allocation5 + $0x50] sm:$0xff]
        %v302 = vld [vmem:[#allocation5 + $0x58] sm:$0xff]
        %v303 = vld [vmem:[#allocation5 + $0x60] sm:$0xff]
        %v304 = vld [vmem:[#allocation5 + $0x68] sm:$0xff]
        %v305 = vld [vmem:[#allocation5 + $0x70] sm:$0xff]
        %v306 = vld [vmem:[#allocation5 + $0x78] sm:$0xff]
        %v307 = vld [vmem:[#allocation5 + $0x80] sm:$0xff]
        %v308 = vld [vmem:[#allocation5 + $0x88] sm:$0xff]
        %v309 = vld [vmem:[#allocation5 + $0x90] sm:$0xff]
        %v310 = vld [vmem:[#allocation5 + $0x98] sm:$0xff]
        %v311 = vld [vmem:[#allocation5 + $0xa0] sm:$0xff]
        %v312 = vld [vmem:[#allocation5 + $0xa8] sm:$0xff]
        %v313 = vld [vmem:[#allocation5 + $0xb0] sm:$0xff]
        %v314 = vld [vmem:[#allocation5 + $0xb8] sm:$0xff]
        %v315 = vld [vmem:[#allocation5 + $0xc0] sm:$0xff]
        %v316 = vld [vmem:[#allocation5 + $0xc8] sm:$0xff]
        %v317 = vld [vmem:[#allocation5 + $0xd0] sm:$0xff]
        %v318 = vld [vmem:[#allocation5 + $0xd8] sm:$0xff]
        %v319 = vld [vmem:[#allocation5 + $0xe0] sm:$0xff]
        %v320 = vld [vmem:[#allocation5 + $0xe8] sm:$0xff]
        %v321 = vld [vmem:[#allocation5 + $0xf0] sm:$0xff]
        %v322 = vld [vmem:[#allocation5 + $0xf8] sm:$0xff]
        %v323 = vld [vmem:[%s2] sm:$0x3]
        %v325 = vlaneseq
        %v326 = vshrl.u32 %v325, 7
        %v327 = vsub.s32 0, %v326
        %v328 = vrot.slane %v323, %v327
        %v329 = vlaneseq
        %v330 = vshrl.u32 %v329, 7
        %v331 = vsub.s32 1, %v330
        %v332 = vrot.slane %v323, %v331
        %v351 = vunpack.c.l.b16 %v275
        %v352 = vunpack.c.h.b16 %v275
        %v353 = vunpack.c.l.b16 %v276
        %v354 = vunpack.c.h.b16 %v276
        %v355 = vunpack.c.l.b16 %v277
        %v356 = vunpack.c.h.b16 %v277
        %v357 = vunpack.c.l.b16 %v278
        %v358 = vunpack.c.h.b16 %v278
        %v359 = vunpack.c.l.b16 %v279
        %v360 = vunpack.c.h.b16 %v279
        %v361 = vunpack.c.l.b16 %v280
        %v362 = vunpack.c.h.b16 %v280
        %v363 = vunpack.c.l.b16 %v281
        %v364 = vunpack.c.h.b16 %v281
        %v365 = vunpack.c.l.b16 %v282
        %v366 = vunpack.c.h.b16 %v282
        %v367 = vunpack.c.l.b16 %v283
        %v368 = vunpack.c.h.b16 %v283
        %v369 = vunpack.c.l.b16 %v284
        %v370 = vunpack.c.h.b16 %v284
        %v371 = vunpack.c.l.b16 %v285
        %v372 = vunpack.c.h.b16 %v285
        %v373 = vunpack.c.l.b16 %v286
        %v374 = vunpack.c.h.b16 %v286
        %v375 = vunpack.c.l.b16 %v287
        %v376 = vunpack.c.h.b16 %v287
        %v377 = vunpack.c.l.b16 %v288
        %v378 = vunpack.c.h.b16 %v288
        %v379 = vunpack.c.l.b16 %v289
        %v380 = vunpack.c.h.b16 %v289
        %v381 = vunpack.c.l.b16 %v290
        %v382 = vunpack.c.h.b16 %v290
        %v383 = vpack.c.b16 %v353, %v351
        %v384 = vpack.c.b16 %v354, %v352
        %v385 = vpack.c.b16 %v357, %v355
        %v386 = vpack.c.b16 %v358, %v356
        %v387 = vpack.c.b16 %v361, %v359
        %v388 = vpack.c.b16 %v362, %v360
        %v389 = vpack.c.b16 %v365, %v363
        %v390 = vpack.c.b16 %v366, %v364
        %v391 = vpack.c.b16 %v369, %v367
        %v392 = vpack.c.b16 %v370, %v368
        %v393 = vpack.c.b16 %v373, %v371
        %v394 = vpack.c.b16 %v374, %v372
        %v395 = vpack.c.b16 %v377, %v375
        %v396 = vpack.c.b16 %v378, %v376
        %v397 = vpack.c.b16 %v381, %v379
        %v398 = vpack.c.b16 %v382, %v380
        %v447 = vunpack.c.l.b16 %v291
        %v448 = vunpack.c.h.b16 %v291
        %v449 = vunpack.c.l.b16 %v292
        %v450 = vunpack.c.h.b16 %v292
        %v451 = vunpack.c.l.b16 %v293
        %v452 = vunpack.c.h.b16 %v293
        %v453 = vunpack.c.l.b16 %v294
        %v454 = vunpack.c.h.b16 %v294
        %v455 = vunpack.c.l.b16 %v295
        %v456 = vunpack.c.h.b16 %v295
        %v457 = vunpack.c.l.b16 %v296
        %v458 = vunpack.c.h.b16 %v296
        %v459 = vunpack.c.l.b16 %v297
        %v460 = vunpack.c.h.b16 %v297
        %v461 = vunpack.c.l.b16 %v298
        %v462 = vunpack.c.h.b16 %v298
        %v463 = vunpack.c.l.b16 %v299
        %v464 = vunpack.c.h.b16 %v299
        %v465 = vunpack.c.l.b16 %v300
        %v466 = vunpack.c.h.b16 %v300
        %v467 = vunpack.c.l.b16 %v301
        %v468 = vunpack.c.h.b16 %v301
        %v469 = vunpack.c.l.b16 %v302
        %v470 = vunpack.c.h.b16 %v302
        %v471 = vunpack.c.l.b16 %v303
        %v472 = vunpack.c.h.b16 %v303
        %v473 = vunpack.c.l.b16 %v304
        %v474 = vunpack.c.h.b16 %v304
        %v475 = vunpack.c.l.b16 %v305
        %v476 = vunpack.c.h.b16 %v305
        %v477 = vunpack.c.l.b16 %v306
        %v478 = vunpack.c.h.b16 %v306
        %v479 = vunpack.c.l.b16 %v307
        %v480 = vunpack.c.h.b16 %v307
        %v481 = vunpack.c.l.b16 %v308
        %v482 = vunpack.c.h.b16 %v308
        %v483 = vunpack.c.l.b16 %v309
        %v484 = vunpack.c.h.b16 %v309
        %v485 = vunpack.c.l.b16 %v310
        %v486 = vunpack.c.h.b16 %v310
        %v487 = vunpack.c.l.b16 %v311
        %v488 = vunpack.c.h.b16 %v311
        %v489 = vunpack.c.l.b16 %v312
        %v490 = vunpack.c.h.b16 %v312
        %v491 = vunpack.c.l.b16 %v313
        %v492 = vunpack.c.h.b16 %v313
        %v493 = vunpack.c.l.b16 %v314
        %v494 = vunpack.c.h.b16 %v314
        %v495 = vunpack.c.l.b16 %v315
        %v496 = vunpack.c.h.b16 %v315
        %v497 = vunpack.c.l.b16 %v316
        %v498 = vunpack.c.h.b16 %v316
        %v499 = vunpack.c.l.b16 %v317
        %v500 = vunpack.c.h.b16 %v317
        %v501 = vunpack.c.l.b16 %v318
        %v502 = vunpack.c.h.b16 %v318
        %v503 = vunpack.c.l.b16 %v319
        %v504 = vunpack.c.h.b16 %v319
        %v505 = vunpack.c.l.b16 %v320
        %v506 = vunpack.c.h.b16 %v320
        %v507 = vunpack.c.l.b16 %v321
        %v508 = vunpack.c.h.b16 %v321
        %v509 = vunpack.c.l.b16 %v322
        %v510 = vunpack.c.h.b16 %v322
        %v511 = vpack.c.b16 %v449, %v447
        %v512 = vpack.c.b16 %v450, %v448
        %v513 = vpack.c.b16 %v453, %v451
        %v514 = vpack.c.b16 %v454, %v452
        %v515 = vpack.c.b16 %v457, %v455
        %v516 = vpack.c.b16 %v458, %v456
        %v517 = vpack.c.b16 %v461, %v459
        %v518 = vpack.c.b16 %v462, %v460
        %v519 = vpack.c.b16 %v465, %v463
        %v520 = vpack.c.b16 %v466, %v464
        %v521 = vpack.c.b16 %v469, %v467
        %v522 = vpack.c.b16 %v470, %v468
        %v523 = vpack.c.b16 %v473, %v471
        %v524 = vpack.c.b16 %v474, %v472
        %v525 = vpack.c.b16 %v477, %v475
        %v526 = vpack.c.b16 %v478, %v476
        %v527 = vpack.c.b16 %v481, %v479
        %v528 = vpack.c.b16 %v482, %v480
        %v529 = vpack.c.b16 %v485, %v483
        %v530 = vpack.c.b16 %v486, %v484
        %v531 = vpack.c.b16 %v489, %v487
        %v532 = vpack.c.b16 %v490, %v488
        %v533 = vpack.c.b16 %v493, %v491
        %v534 = vpack.c.b16 %v494, %v492
        %v535 = vpack.c.b16 %v497, %v495
        %v536 = vpack.c.b16 %v498, %v496
        %v537 = vpack.c.b16 %v501, %v499
        %v538 = vpack.c.b16 %v502, %v500
        %v539 = vpack.c.b16 %v505, %v503
        %v540 = vpack.c.b16 %v506, %v504
        %v541 = vpack.c.b16 %v509, %v507
        %v542 = vpack.c.b16 %v510, %v508
        %575 = vmatprep.subr.bf16.mxu0 %v526
        %576 = vmatpush1.bf16.msra.mxu0 %v525
        %577 = vmatprep.subr.bf16.mxu0 %v524
        %578 = vmatpush1.bf16.msra.mxu0 %v523
        %579 = vmatprep.subr.bf16.mxu0 %v522
        %580 = vmatpush1.bf16.msra.mxu0 %v521
        %581 = vmatprep.subr.bf16.mxu0 %v520
        %582 = vmatpush1.bf16.msra.mxu0 %v519
        %583 = vmatprep.subr.bf16.mxu0 %v518
        %584 = vmatpush1.bf16.msra.mxu0 %v517
        %585 = vmatprep.subr.bf16.mxu0 %v516
        %586 = vmatpush1.bf16.msra.mxu0 %v515
        %587 = vmatprep.subr.bf16.mxu0 %v514
        %588 = vmatpush1.bf16.msra.mxu0 %v513
        %589 = vmatprep.subr.bf16.mxu0 %v512
        %590 = vmatpush1.bf16.msra.mxu0 %v511
        %591 = vmatprep.subr.bf16.mxu0 %v542
        %592 = vmatpush2.bf16.msra.mxu0 %v541
        %593 = vmatprep.subr.bf16.mxu0 %v540
        %594 = vmatpush2.bf16.msra.mxu0 %v539
        %595 = vmatprep.subr.bf16.mxu0 %v538
        %596 = vmatpush2.bf16.msra.mxu0 %v537
        %597 = vmatprep.subr.bf16.mxu0 %v536
        %598 = vmatpush2.bf16.msra.mxu0 %v535
        %599 = vmatprep.subr.bf16.mxu0 %v534
        %600 = vmatpush2.bf16.msra.mxu0 %v533
        %601 = vmatprep.subr.bf16.mxu0 %v532
        %602 = vmatpush2.bf16.msra.mxu0 %v531
        %603 = vmatprep.subr.bf16.mxu0 %v530
        %604 = vmatpush2.bf16.msra.mxu0 %v529
        %605 = vmatprep.subr.bf16.mxu0 %v528
        %606 = vmatpush2.bf16.msra.mxu0 %v527
        %607 = vmatprep.mubr.bf16.mxu0 %v384
        %608 = vmatmul.mubr.bf16.gmra.mxu0 %v383
        %v609 = vpop.f32.mrf.mxu0
        %v610 = vadd.f32 %v328, %v609
        %v611 = vpop.f32.mrf.mxu0
        %v612 = vadd.f32 %v332, %v611
        %v613 = vpop.f32.mrf.mxu0
        %v614 = vadd.f32 %v328, %v613
        %v615 = vpop.f32.mrf.mxu0
        %v616 = vadd.f32 %v332, %v615
        %617 = vmatprep.mubr.bf16.mxu0 %v386
        %618 = vmatmul.mubr.bf16.gmra.mxu0 %v385
        %v619 = vpop.f32.mrf.mxu0
        %v620 = vadd.f32 %v328, %v619
        %v621 = vpop.f32.mrf.mxu0
        %v622 = vadd.f32 %v332, %v621
        %v623 = vpop.f32.mrf.mxu0
        %v624 = vadd.f32 %v328, %v623
        %v625 = vpop.f32.mrf.mxu0
        %v626 = vadd.f32 %v332, %v625
        %627 = vmatprep.mubr.bf16.mxu0 %v388
        %628 = vmatmul.mubr.bf16.gmra.mxu0 %v387
        %v629 = vpop.f32.mrf.mxu0
        %v630 = vadd.f32 %v328, %v629
        %v631 = vpop.f32.mrf.mxu0
        %v632 = vadd.f32 %v332, %v631
        %v633 = vpop.f32.mrf.mxu0
        %v634 = vadd.f32 %v328, %v633
        %v635 = vpop.f32.mrf.mxu0
        %v636 = vadd.f32 %v332, %v635
        %637 = vmatprep.mubr.bf16.mxu0 %v390
        %638 = vmatmul.mubr.bf16.gmra.mxu0 %v389
        %v639 = vpop.f32.mrf.mxu0
        %v640 = vadd.f32 %v328, %v639
        %v641 = vpop.f32.mrf.mxu0
        %v642 = vadd.f32 %v332, %v641
        %v643 = vpop.f32.mrf.mxu0
        %v644 = vadd.f32 %v328, %v643
        %v645 = vpop.f32.mrf.mxu0
        %v646 = vadd.f32 %v332, %v645
        %647 = vmatprep.mubr.bf16.mxu0 %v392
        %648 = vmatmul.mubr.bf16.gmra.mxu0 %v391
        %v649 = vpop.f32.mrf.mxu0
        %v650 = vadd.f32 %v328, %v649
        %v651 = vpop.f32.mrf.mxu0
        %v652 = vadd.f32 %v332, %v651
        %v653 = vpop.f32.mrf.mxu0
        %v654 = vadd.f32 %v328, %v653
        %v655 = vpop.f32.mrf.mxu0
        %v656 = vadd.f32 %v332, %v655
        %657 = vmatprep.mubr.bf16.mxu0 %v394
        %658 = vmatmul.mubr.bf16.gmra.mxu0 %v393
        %v659 = vpop.f32.mrf.mxu0
        %v660 = vadd.f32 %v328, %v659
        %v661 = vpop.f32.mrf.mxu0
        %v662 = vadd.f32 %v332, %v661
        %v663 = vpop.f32.mrf.mxu0
        %v664 = vadd.f32 %v328, %v663
        %v665 = vpop.f32.mrf.mxu0
        %v666 = vadd.f32 %v332, %v665
        %667 = vmatprep.mubr.bf16.mxu0 %v396
        %668 = vmatmul.mubr.bf16.gmra.mxu0 %v395
        %v669 = vpop.f32.mrf.mxu0
        %v670 = vadd.f32 %v328, %v669
        %v671 = vpop.f32.mrf.mxu0
        %v672 = vadd.f32 %v332, %v671
        %v673 = vpop.f32.mrf.mxu0
        %v674 = vadd.f32 %v328, %v673
        %v675 = vpop.f32.mrf.mxu0
        %v676 = vadd.f32 %v332, %v675
        %677 = vmatprep.mubr.bf16.mxu0 %v398
        %678 = vmatmul.mubr.bf16.gmra.mxu0 %v397
        %v679 = vpop.f32.mrf.mxu0
        %v680 = vadd.f32 %v328, %v679
        %v681 = vpop.f32.mrf.mxu0
        %v682 = vadd.f32 %v332, %v681
        %v683 = vpop.f32.mrf.mxu0
        %v684 = vadd.f32 %v328, %v683
        %v685 = vpop.f32.mrf.mxu0
        %v686 = vadd.f32 %v332, %v685
        %687 = vdwg.mxu0
        %v688 = vmax.f32 %v610, 0.0
        %v689 = vmax.f32 %v612, 0.0
        %v690 = vmax.f32 %v614, 0.0
        %v691 = vmax.f32 %v616, 0.0
        %v692 = vmax.f32 %v620, 0.0
        %v693 = vmax.f32 %v622, 0.0
        %v694 = vmax.f32 %v624, 0.0
        %v695 = vmax.f32 %v626, 0.0
        %v696 = vmax.f32 %v630, 0.0
        %v697 = vmax.f32 %v632, 0.0
        %v698 = vmax.f32 %v634, 0.0
        %v699 = vmax.f32 %v636, 0.0
        %v700 = vmax.f32 %v640, 0.0
        %v701 = vmax.f32 %v642, 0.0
        %v702 = vmax.f32 %v644, 0.0
        %v703 = vmax.f32 %v646, 0.0
        %v704 = vmax.f32 %v650, 0.0
        %v705 = vmax.f32 %v652, 0.0
        %v706 = vmax.f32 %v654, 0.0
        %v707 = vmax.f32 %v656, 0.0
        %v708 = vmax.f32 %v660, 0.0
        %v709 = vmax.f32 %v662, 0.0
        %v710 = vmax.f32 %v664, 0.0
        %v711 = vmax.f32 %v666, 0.0
        %v712 = vmax.f32 %v670, 0.0
        %v713 = vmax.f32 %v672, 0.0
        %v714 = vmax.f32 %v674, 0.0
        %v715 = vmax.f32 %v676, 0.0
        %v716 = vmax.f32 %v680, 0.0
        %v717 = vmax.f32 %v682, 0.0
        %v718 = vmax.f32 %v684, 0.0
        %v719 = vmax.f32 %v686, 0.0
        %v720 = vpack.c.bf16 %v690, %v688
        %v721 = vpack.c.bf16 %v691, %v689
        %v722 = vpack.c.bf16 %v694, %v692
        %v723 = vpack.c.bf16 %v695, %v693
        %v724 = vpack.c.bf16 %v698, %v696
        %v725 = vpack.c.bf16 %v699, %v697
        %v726 = vpack.c.bf16 %v702, %v700
        %v727 = vpack.c.bf16 %v703, %v701
        %v728 = vpack.c.bf16 %v706, %v704
        %v729 = vpack.c.bf16 %v707, %v705
        %v730 = vpack.c.bf16 %v710, %v708
        %v731 = vpack.c.bf16 %v711, %v709
        %v732 = vpack.c.bf16 %v714, %v712
        %v733 = vpack.c.bf16 %v715, %v713
        %v734 = vpack.c.bf16 %v718, %v716
        %v735 = vpack.c.bf16 %v719, %v717
        %v736 = vld [vmem:[#allocation7] sm:$0xff]
        %v737 = vld [vmem:[#allocation7 + $0x8] sm:$0xff]
        %v738 = vld [vmem:[#allocation7 + $0x10] sm:$0xff]
        %v739 = vld [vmem:[#allocation7 + $0x18] sm:$0xff]
        %v740 = vld [vmem:[#allocation7 + $0x20] sm:$0xff]
        %v741 = vld [vmem:[#allocation7 + $0x28] sm:$0xff]
        %v742 = vld [vmem:[#allocation7 + $0x30] sm:$0xff]
        %v743 = vld [vmem:[#allocation7 + $0x38] sm:$0xff]
        %v744 = vld [vmem:[#allocation7 + $0x40] sm:$0xff]
        %v745 = vld [vmem:[#allocation7 + $0x48] sm:$0xff]
        %v746 = vld [vmem:[#allocation7 + $0x50] sm:$0xff]
        %v747 = vld [vmem:[#allocation7 + $0x58] sm:$0xff]
        %v748 = vld [vmem:[#allocation7 + $0x60] sm:$0xff]
        %v749 = vld [vmem:[#allocation7 + $0x68] sm:$0xff]
        %v750 = vld [vmem:[#allocation7 + $0x70] sm:$0xff]
        %v751 = vld [vmem:[#allocation7 + $0x78] sm:$0xff]
        %v752 = vld [vmem:[#allocation7 + $0x80] sm:$0xff]
        %v753 = vld [vmem:[#allocation7 + $0x88] sm:$0xff]
        %v754 = vld [vmem:[#allocation7 + $0x90] sm:$0xff]
        %v755 = vld [vmem:[#allocation7 + $0x98] sm:$0xff]
        %v756 = vld [vmem:[#allocation7 + $0xa0] sm:$0xff]
        %v757 = vld [vmem:[#allocation7 + $0xa8] sm:$0xff]
        %v758 = vld [vmem:[#allocation7 + $0xb0] sm:$0xff]
        %v759 = vld [vmem:[#allocation7 + $0xb8] sm:$0xff]
        %v760 = vld [vmem:[#allocation7 + $0xc0] sm:$0xff]
        %v761 = vld [vmem:[#allocation7 + $0xc8] sm:$0xff]
        %v762 = vld [vmem:[#allocation7 + $0xd0] sm:$0xff]
        %v763 = vld [vmem:[#allocation7 + $0xd8] sm:$0xff]
        %v764 = vld [vmem:[#allocation7 + $0xe0] sm:$0xff]
        %v765 = vld [vmem:[#allocation7 + $0xe8] sm:$0xff]
        %v766 = vld [vmem:[#allocation7 + $0xf0] sm:$0xff]
        %v767 = vld [vmem:[#allocation7 + $0xf8] sm:$0xff]
        %v768 = vld [vmem:[%s4] sm:$0x3]
        %v770 = vlaneseq
        %v771 = vshrl.u32 %v770, 7
        %v772 = vsub.s32 0, %v771
        %v773 = vrot.slane %v768, %v772
        %v774 = vlaneseq
        %v775 = vshrl.u32 %v774, 7
        %v776 = vsub.s32 1, %v775
        %v777 = vrot.slane %v768, %v776
        %v812 = vunpack.c.l.b16 %v736
        %v813 = vunpack.c.h.b16 %v736
        %v814 = vunpack.c.l.b16 %v737
        %v815 = vunpack.c.h.b16 %v737
        %v816 = vunpack.c.l.b16 %v738
        %v817 = vunpack.c.h.b16 %v738
        %v818 = vunpack.c.l.b16 %v739
        %v819 = vunpack.c.h.b16 %v739
        %v820 = vunpack.c.l.b16 %v740
        %v821 = vunpack.c.h.b16 %v740
        %v822 = vunpack.c.l.b16 %v741
        %v823 = vunpack.c.h.b16 %v741
        %v824 = vunpack.c.l.b16 %v742
        %v825 = vunpack.c.h.b16 %v742
        %v826 = vunpack.c.l.b16 %v743
        %v827 = vunpack.c.h.b16 %v743
        %v828 = vunpack.c.l.b16 %v744
        %v829 = vunpack.c.h.b16 %v744
        %v830 = vunpack.c.l.b16 %v745
        %v831 = vunpack.c.h.b16 %v745
        %v832 = vunpack.c.l.b16 %v746
        %v833 = vunpack.c.h.b16 %v746
        %v834 = vunpack.c.l.b16 %v747
        %v835 = vunpack.c.h.b16 %v747
        %v836 = vunpack.c.l.b16 %v748
        %v837 = vunpack.c.h.b16 %v748
        %v838 = vunpack.c.l.b16 %v749
        %v839 = vunpack.c.h.b16 %v749
        %v840 = vunpack.c.l.b16 %v750
        %v841 = vunpack.c.h.b16 %v750
        %v842 = vunpack.c.l.b16 %v751
        %v843 = vunpack.c.h.b16 %v751
        %v844 = vunpack.c.l.b16 %v752
        %v845 = vunpack.c.h.b16 %v752
        %v846 = vunpack.c.l.b16 %v753
        %v847 = vunpack.c.h.b16 %v753
        %v848 = vunpack.c.l.b16 %v754
        %v849 = vunpack.c.h.b16 %v754
        %v850 = vunpack.c.l.b16 %v755
        %v851 = vunpack.c.h.b16 %v755
        %v852 = vunpack.c.l.b16 %v756
        %v853 = vunpack.c.h.b16 %v756
        %v854 = vunpack.c.l.b16 %v757
        %v855 = vunpack.c.h.b16 %v757
        %v856 = vunpack.c.l.b16 %v758
        %v857 = vunpack.c.h.b16 %v758
        %v858 = vunpack.c.l.b16 %v759
        %v859 = vunpack.c.h.b16 %v759
        %v860 = vunpack.c.l.b16 %v760
        %v861 = vunpack.c.h.b16 %v760
        %v862 = vunpack.c.l.b16 %v761
        %v863 = vunpack.c.h.b16 %v761
        %v864 = vunpack.c.l.b16 %v762
        %v865 = vunpack.c.h.b16 %v762
        %v866 = vunpack.c.l.b16 %v763
        %v867 = vunpack.c.h.b16 %v763
        %v868 = vunpack.c.l.b16 %v764
        %v869 = vunpack.c.h.b16 %v764
        %v870 = vunpack.c.l.b16 %v765
        %v871 = vunpack.c.h.b16 %v765
        %v872 = vunpack.c.l.b16 %v766
        %v873 = vunpack.c.h.b16 %v766
        %v874 = vunpack.c.l.b16 %v767
        %v875 = vunpack.c.h.b16 %v767
        %v876 = vpack.c.b16 %v814, %v812
        %v877 = vpack.c.b16 %v815, %v813
        %v878 = vpack.c.b16 %v818, %v816
        %v879 = vpack.c.b16 %v819, %v817
        %v880 = vpack.c.b16 %v822, %v820
        %v881 = vpack.c.b16 %v823, %v821
        %v882 = vpack.c.b16 %v826, %v824
        %v883 = vpack.c.b16 %v827, %v825
        %v884 = vpack.c.b16 %v830, %v828
        %v885 = vpack.c.b16 %v831, %v829
        %v886 = vpack.c.b16 %v834, %v832
        %v887 = vpack.c.b16 %v835, %v833
        %v888 = vpack.c.b16 %v838, %v836
        %v889 = vpack.c.b16 %v839, %v837
        %v890 = vpack.c.b16 %v842, %v840
        %v891 = vpack.c.b16 %v843, %v841
        %v892 = vpack.c.b16 %v846, %v844
        %v893 = vpack.c.b16 %v847, %v845
        %v894 = vpack.c.b16 %v850, %v848
        %v895 = vpack.c.b16 %v851, %v849
        %v896 = vpack.c.b16 %v854, %v852
        %v897 = vpack.c.b16 %v855, %v853
        %v898 = vpack.c.b16 %v858, %v856
        %v899 = vpack.c.b16 %v859, %v857
        %v900 = vpack.c.b16 %v862, %v860
        %v901 = vpack.c.b16 %v863, %v861
        %v902 = vpack.c.b16 %v866, %v864
        %v903 = vpack.c.b16 %v867, %v865
        %v904 = vpack.c.b16 %v870, %v868
        %v905 = vpack.c.b16 %v871, %v869
        %v906 = vpack.c.b16 %v874, %v872
        %v907 = vpack.c.b16 %v875, %v873
        %940 = vmatprep.subr.bf16.mxu0 %v891
        %941 = vmatpush1.bf16.msra.mxu0 %v890
        %942 = vmatprep.subr.bf16.mxu0 %v889
        %943 = vmatpush1.bf16.msra.mxu0 %v888
        %944 = vmatprep.subr.bf16.mxu0 %v887
        %945 = vmatpush1.bf16.msra.mxu0 %v886
        %946 = vmatprep.subr.bf16.mxu0 %v885
        %947 = vmatpush1.bf16.msra.mxu0 %v884
        %948 = vmatprep.subr.bf16.mxu0 %v883
        %949 = vmatpush1.bf16.msra.mxu0 %v882
        %950 = vmatprep.subr.bf16.mxu0 %v881
        %951 = vmatpush1.bf16.msra.mxu0 %v880
        %952 = vmatprep.subr.bf16.mxu0 %v879
        %953 = vmatpush1.bf16.msra.mxu0 %v878
        %954 = vmatprep.subr.bf16.mxu0 %v877
        %955 = vmatpush1.bf16.msra.mxu0 %v876
        %956 = vmatprep.subr.bf16.mxu0 %v907
        %957 = vmatpush2.bf16.msra.mxu0 %v906
        %958 = vmatprep.subr.bf16.mxu0 %v905
        %959 = vmatpush2.bf16.msra.mxu0 %v904
        %960 = vmatprep.subr.bf16.mxu0 %v903
        %961 = vmatpush2.bf16.msra.mxu0 %v902
        %962 = vmatprep.subr.bf16.mxu0 %v901
        %963 = vmatpush2.bf16.msra.mxu0 %v900
        %964 = vmatprep.subr.bf16.mxu0 %v899
        %965 = vmatpush2.bf16.msra.mxu0 %v898
        %966 = vmatprep.subr.bf16.mxu0 %v897
        %967 = vmatpush2.bf16.msra.mxu0 %v896
        %968 = vmatprep.subr.bf16.mxu0 %v895
        %969 = vmatpush2.bf16.msra.mxu0 %v894
        %970 = vmatprep.subr.bf16.mxu0 %v893
        %971 = vmatpush2.bf16.msra.mxu0 %v892
        %972 = vmatprep.mubr.bf16.mxu0 %v721
        %973 = vmatmul.mubr.bf16.gmra.mxu0 %v720
        %v974 = vpop.f32.mrf.mxu0
        %v975 = vadd.f32 %v773, %v974
        %v976 = vpop.f32.mrf.mxu0
        %v977 = vadd.f32 %v777, %v976
        %v978 = vpop.f32.mrf.mxu0
        %v979 = vadd.f32 %v773, %v978
        %v980 = vpop.f32.mrf.mxu0
        %v981 = vadd.f32 %v777, %v980
        %982 = vmatprep.mubr.bf16.mxu0 %v723
        %983 = vmatmul.mubr.bf16.gmra.mxu0 %v722
        %v984 = vpop.f32.mrf.mxu0
        %v985 = vadd.f32 %v773, %v984
        %v986 = vpop.f32.mrf.mxu0
        %v987 = vadd.f32 %v777, %v986
        %v988 = vpop.f32.mrf.mxu0
        %v989 = vadd.f32 %v773, %v988
        %v990 = vpop.f32.mrf.mxu0
        %v991 = vadd.f32 %v777, %v990
        %992 = vmatprep.mubr.bf16.mxu0 %v725
        %993 = vmatmul.mubr.bf16.gmra.mxu0 %v724
        %v994 = vpop.f32.mrf.mxu0
        %v995 = vadd.f32 %v773, %v994
        %v996 = vpop.f32.mrf.mxu0
        %v997 = vadd.f32 %v777, %v996
        %v998 = vpop.f32.mrf.mxu0
        %v999 = vadd.f32 %v773, %v998
        %v1000 = vpop.f32.mrf.mxu0
        %v1001 = vadd.f32 %v777, %v1000
        %1002 = vmatprep.mubr.bf16.mxu0 %v727
        %1003 = vmatmul.mubr.bf16.gmra.mxu0 %v726
        %v1004 = vpop.f32.mrf.mxu0
        %v1005 = vadd.f32 %v773, %v1004
        %v1006 = vpop.f32.mrf.mxu0
        %v1007 = vadd.f32 %v777, %v1006
        %v1008 = vpop.f32.mrf.mxu0
        %v1009 = vadd.f32 %v773, %v1008
        %v1010 = vpop.f32.mrf.mxu0
        %v1011 = vadd.f32 %v777, %v1010
        %1012 = vmatprep.mubr.bf16.mxu0 %v729
        %1013 = vmatmul.mubr.bf16.gmra.mxu0 %v728
        %v1014 = vpop.f32.mrf.mxu0
        %v1015 = vadd.f32 %v773, %v1014
        %v1016 = vpop.f32.mrf.mxu0
        %v1017 = vadd.f32 %v777, %v1016
        %v1018 = vpop.f32.mrf.mxu0
        %v1019 = vadd.f32 %v773, %v1018
        %v1020 = vpop.f32.mrf.mxu0
        %v1021 = vadd.f32 %v777, %v1020
        %1022 = vmatprep.mubr.bf16.mxu0 %v731
        %1023 = vmatmul.mubr.bf16.gmra.mxu0 %v730
        %v1024 = vpop.f32.mrf.mxu0
        %v1025 = vadd.f32 %v773, %v1024
        %v1026 = vpop.f32.mrf.mxu0
        %v1027 = vadd.f32 %v777, %v1026
        %v1028 = vpop.f32.mrf.mxu0
        %v1029 = vadd.f32 %v773, %v1028
        %v1030 = vpop.f32.mrf.mxu0
        %v1031 = vadd.f32 %v777, %v1030
        %1032 = vmatprep.mubr.bf16.mxu0 %v733
        %1033 = vmatmul.mubr.bf16.gmra.mxu0 %v732
        %v1034 = vpop.f32.mrf.mxu0
        %v1035 = vadd.f32 %v773, %v1034
        %v1036 = vpop.f32.mrf.mxu0
        %v1037 = vadd.f32 %v777, %v1036
        %v1038 = vpop.f32.mrf.mxu0
        %v1039 = vadd.f32 %v773, %v1038
        %v1040 = vpop.f32.mrf.mxu0
        %v1041 = vadd.f32 %v777, %v1040
        %1042 = vmatprep.mubr.bf16.mxu0 %v735
        %1043 = vmatmul.mubr.bf16.gmra.mxu0 %v734
        %v1044 = vpop.f32.mrf.mxu0
        %v1045 = vadd.f32 %v773, %v1044
        %v1046 = vpop.f32.mrf.mxu0
        %v1047 = vadd.f32 %v777, %v1046
        %v1048 = vpop.f32.mrf.mxu0
        %v1049 = vadd.f32 %v773, %v1048
        %v1050 = vpop.f32.mrf.mxu0
        %v1051 = vadd.f32 %v777, %v1050
        %1052 = vdwg.mxu0
        %v1053 = vpack.c.bf16 %v979, %v975
        %v1054 = vpack.c.bf16 %v981, %v977
        %v1055 = vpack.c.bf16 %v989, %v985
        %v1056 = vpack.c.bf16 %v991, %v987
        %v1057 = vpack.c.bf16 %v999, %v995
        %v1058 = vpack.c.bf16 %v1001, %v997
        %v1059 = vpack.c.bf16 %v1009, %v1005
        %v1060 = vpack.c.bf16 %v1011, %v1007
        %v1061 = vpack.c.bf16 %v1019, %v1015
        %v1062 = vpack.c.bf16 %v1021, %v1017
        %v1063 = vpack.c.bf16 %v1029, %v1025
        %v1064 = vpack.c.bf16 %v1031, %v1027
        %v1065 = vpack.c.bf16 %v1039, %v1035
        %v1066 = vpack.c.bf16 %v1041, %v1037
        %v1067 = vpack.c.bf16 %v1049, %v1045
        %v1068 = vpack.c.bf16 %v1051, %v1047
        %v1085 = vunpack.c.l.b16 %v1053
        %v1086 = vunpack.c.l.b16 %v1054
        %v1087 = vunpack.c.h.b16 %v1053
        %v1088 = vunpack.c.h.b16 %v1054
        %v1089 = vunpack.c.l.b16 %v1055
        %v1090 = vunpack.c.l.b16 %v1056
        %v1091 = vunpack.c.h.b16 %v1055
        %v1092 = vunpack.c.h.b16 %v1056
        %v1093 = vunpack.c.l.b16 %v1057
        %v1094 = vunpack.c.l.b16 %v1058
        %v1095 = vunpack.c.h.b16 %v1057
        %v1096 = vunpack.c.h.b16 %v1058
        %v1097 = vunpack.c.l.b16 %v1059
        %v1098 = vunpack.c.l.b16 %v1060
        %v1099 = vunpack.c.h.b16 %v1059
        %v1100 = vunpack.c.h.b16 %v1060
        %v1101 = vunpack.c.l.b16 %v1061
        %v1102 = vunpack.c.l.b16 %v1062
        %v1103 = vunpack.c.h.b16 %v1061
        %v1104 = vunpack.c.h.b16 %v1062
        %v1105 = vunpack.c.l.b16 %v1063
        %v1106 = vunpack.c.l.b16 %v1064
        %v1107 = vunpack.c.h.b16 %v1063
        %v1108 = vunpack.c.h.b16 %v1064
        %v1109 = vunpack.c.l.b16 %v1065
        %v1110 = vunpack.c.l.b16 %v1066
        %v1111 = vunpack.c.h.b16 %v1065
        %v1112 = vunpack.c.h.b16 %v1066
        %v1113 = vunpack.c.l.b16 %v1067
        %v1114 = vunpack.c.l.b16 %v1068
        %v1115 = vunpack.c.h.b16 %v1067
        %v1116 = vunpack.c.h.b16 %v1068
        %v1117 = vpack.c.b16 %v1086, %v1085
        %v1118 = vpack.c.b16 %v1088, %v1087
        %v1119 = vpack.c.b16 %v1090, %v1089
        %v1120 = vpack.c.b16 %v1092, %v1091
        %v1121 = vpack.c.b16 %v1094, %v1093
        %v1122 = vpack.c.b16 %v1096, %v1095
        %v1123 = vpack.c.b16 %v1098, %v1097
        %v1124 = vpack.c.b16 %v1100, %v1099
        %v1125 = vpack.c.b16 %v1102, %v1101
        %v1126 = vpack.c.b16 %v1104, %v1103
        %v1127 = vpack.c.b16 %v1106, %v1105
        %v1128 = vpack.c.b16 %v1108, %v1107
        %v1129 = vpack.c.b16 %v1110, %v1109
        %v1130 = vpack.c.b16 %v1112, %v1111
        %v1131 = vpack.c.b16 %v1114, %v1113
        %v1132 = vpack.c.b16 %v1116, %v1115
        %1149 = vst [vmem:[%s272] sm:$0xff] %v1117
        %1150 = vst [vmem:[%s272 + $0x8] sm:$0xff] %v1118
        %1151 = vst [vmem:[%s272 + $0x10] sm:$0xff] %v1119
        %1152 = vst [vmem:[%s272 + $0x18] sm:$0xff] %v1120
        %1153 = vst [vmem:[%s272 + $0x20] sm:$0xff] %v1121
        %1154 = vst [vmem:[%s272 + $0x28] sm:$0xff] %v1122
        %1155 = vst [vmem:[%s272 + $0x30] sm:$0xff] %v1123
        %1156 = vst [vmem:[%s272 + $0x38] sm:$0xff] %v1124
        %1157 = vst [vmem:[%s272 + $0x40] sm:$0xff] %v1125
        %1158 = vst [vmem:[%s272 + $0x48] sm:$0xff] %v1126
        %1159 = vst [vmem:[%s272 + $0x50] sm:$0xff] %v1127
        %1160 = vst [vmem:[%s272 + $0x58] sm:$0xff] %v1128
        %1161 = vst [vmem:[%s272 + $0x60] sm:$0xff] %v1129
        %1162 = vst [vmem:[%s272 + $0x68] sm:$0xff] %v1130
        %1163 = vst [vmem:[%s272 + $0x70] sm:$0xff] %v1131
        %1164 = vst [vmem:[%s272 + $0x78] sm:$0xff] %v1132
        %s1165 = sand.u32 %s141, 1
        %s1166 = scalar_lea.sflag [#allocation4], %s1165
        %s1167 = sand.u32 %s141, 1
        %s1168 = smul.addr %s1167, 128
        %s1169 = scalar_lea.vmem [#allocation8], %s1168
        // Predicated region
        $region53: #{_mlp_pallas_call.1} parent=39 // pred_check
          %p1170 = pneg %p151
        $region54: #{_mlp_pallas_call.1} parent=39 // pred_check_branch
          %1172 = sbr.rel (%p1170) target = $region56
        $region55: #{_mlp_pallas_call.1} parent=39 // pred_region
          %s1173 = smul.u32 16, %s23
          %s1175 = ssub.s32 2048, 2048
          %1176 = vsyncadd %s1166, %s1175
          %s1177 = smul.addr %s1173, 2
          %s1178 = smul.addr %s1177, 64
          %s1179 = scalar_lea.hbm %s5, %s1178
          %s1180 = sshll.u32 %s1169, 4
          %s1181 = int_to_ptr.vmem [resolvable:$true] %s1180
          %1186 = dma.vmem_to_hbm [thread:$0]  %s1181, 2048, %s1179, %s1166, 128, 128, 8
        $region56: #{_mlp_pallas_call.1} parent=39 // pred_fallthru
          _
      $region40: #{_mlp_pallas_call.1} parent=5 // pred_fallthru
        _
      %p1187 = scmp.le.s32.totalorder 2, %s18
      // Predicated region
      $region57: #{_mlp_pallas_call.1} parent=5 // pred_check
        %p1188 = pneg %p1187
      $region58: #{_mlp_pallas_call.1} parent=5 // pred_check_branch
        %1190 = sbr.rel (%p1188) target = $region60
      $region59: #{_mlp_pallas_call.1} parent=5 // pred_region
        %s1191 = ssub.s32 %s18, 2
        // Predicated region
        $region61: #{_mlp_pallas_call.1} parent=59 // pred_check
          %p1192 = pneg %p157
        $region62: #{_mlp_pallas_call.1} parent=59 // pred_check_branch
          %1194 = sbr.rel (%p1192) target = $region64
        $region63: #{_mlp_pallas_call.1} parent=59 // pred_region
          %s1195 = sand.u32 %s142, 1
          %s1196 = scalar_lea.sflag [#allocation4], %s1195
          %s1197 = sand.u32 %s142, 1
          %s1198 = smul.addr %s1197, 128
          %s1199 = scalar_lea.vmem [#allocation8], %s1198
          %1200 = dma.done %s1196, 2048
        $region64: #{_mlp_pallas_call.1} parent=59 // pred_fallthru
          _
      $region60: #{_mlp_pallas_call.1} parent=5 // pred_fallthru
        _
    $region6: #{_mlp_pallas_call.1} parent=1 // loop_footer
      %s22 = sadd.s32 1, %s18
    $region7: #{_mlp_pallas_call.1} parent=1 // loop_footer_branch
      %17 = sbr.rel target = $region3
    $region8: #{_mlp_pallas_call.1} parent=1 // loop_exit
      _
    %1201 = vsyncpa [#allocation3], 1
    %s1202 = scalar_lea.sflag [#allocation3], 1
    %1203 = vsyncpa %s1202, 1
    %1204 = vsyncpa [#allocation6], 1
    %1205 = vsyncpa [#allocation4], 1
    %s1206 = scalar_lea.sflag [#allocation4], 1
    %1207 = vsyncpa %s1206, 1

// kernel: _mlp_pallas_call.1
$region0: #{_mlp_pallas_call.1}
  #allocation0 [shape = 'u32[]', space=smem, size = 0x4, offset = 0x4, fixed_abs, tag = 'smem constant byte address 0x4 - core index']
  #allocation1 [shape = 'u32[144,128]{1,0:T(1,128)}', space=vmem, size = 0x12000, scoped, tag = 'internal scratch']
  %s0 = inlined_call_operand.hbm [shape: bf16[512,256], index: 0, kind: input, shape index: {}]
  %s1 = inlined_call_operand.hbm [shape: bf16[256,256], index: 1, kind: input, shape index: {}]
  %s2 = inlined_call_operand.vmem [shape: f32[1,256], index: 2, kind: input, shape index: {}]
  %s3 = inlined_call_operand.hbm [shape: bf16[256,256], index: 3, kind: input, shape index: {}]
  %s4 = inlined_call_operand.vmem [shape: f32[1,256], index: 4, kind: input, shape index: {}]
  %s5 = inlined_call_operand.hbm [shape: bf16[512,256], index: 5, kind: output, shape index: {}]
  %s6 = sld [smem:[#allocation0]]
  $region65: #{_mlp_pallas_call.1} parent=0
    _
  %s8 = ssub.s32 1, %s6
  %s9 = scalar_select 0, %s8, %s6
  $region1: #{_mlp_pallas_call.1} parent=0
    #allocation2 [shape = 'u8[131072]{0}', space=vmem, size = 0x20000, scoped, tag = 'input window, operand 0']
    #allocation3 [shape = 's32[2]{0}', space=sflag, size = 0x8, scoped, tag = 'scoped memory for _mlp_pallas_call.1']
    #allocation4 [shape = 's32[2]{0}', space=sflag, size = 0x8, scoped, tag = 'scoped memory for _mlp_pallas_call.1']
    #allocation5 [shape = 'u8[131072]{0}', space=vmem, size = 0x20000, scoped, tag = 'input window, operand 1, single buffered']
    #allocation6 [shape = 's32[1]{0}', space=sflag, size = 0x4, scoped, tag = 'scoped memory for _mlp_pallas_call.1']
    #allocation7 [shape = 'u8[131072]{0}', space=vmem, size = 0x20000, scoped, tag = 'input window, operand 3, single buffered']
    #allocation8 [shape = 'u8[131072]{0}', space=vmem, size = 0x20000, scoped, tag = 'output window, operand 0']
    %10 = vsyncpa [#allocation3], 0
    %s11 = scalar_lea.sflag [#allocation3], 1
    %12 = vsyncpa %s11, 0
    %13 = vsyncpa [#allocation6], 0
    %14 = vsyncpa [#allocation4], 0
    %s15 = scalar_lea.sflag [#allocation4], 1
    %16 = vsyncpa %s15, 0
    loop: start=0, step=1, limit=6
    $region2: #{_mlp_pallas_call.1} parent=1 // loop_pre_header
      _
    $region3: #{_mlp_pallas_call.1} parent=1 // loop_header
      %s18 = sphi 0, %s22
      %p19 = scmp.ge.s32.totalorder %s18, 6
      %s28 = sphi 0, %s30
      %s31 = sphi 0, %s28
      %s32 = sphi 0, %s31
      %s48 = sphi 0, %s32
      %s52 = sphi 0, %s52
      %s54 = sphi 0, %s52
      %s55 = sphi 0, %s54
      %s69 = sphi 0, %s55
      %s73 = sphi 0, %s73
      %s75 = sphi 0, %s73
      %s76 = sphi 0, %s75
      %s90 = sphi 0, %s76
      %s94 = sphi 0, %s94
      %s96 = sphi 0, %s94
      %s97 = sphi 0, %s96
      %s111 = sphi 0, %s97
      %s115 = sphi 0, %s115
      %s117 = sphi 0, %s115
      %s118 = sphi 0, %s117
      %s132 = sphi 0, %s118
      %s138 = sphi 0, %s140
      %s141 = sphi 0, %s138
      %s142 = sphi 0, %s141
      %s158 = sphi 0, %s142
    $region4: #{_mlp_pallas_call.1} parent=1 // loop_header_branch
      %21 = sbr.rel (%p19) target = $region8
    $region5: #{_mlp_pallas_call.1} parent=1 // loop_body
      %s23 = ssub.s32 %s18, 1
      %s24 = ssub.s32 %s18, 2
      %s25 = sadd.s32 %s18, 1
      %s26 = ssub.s32 %s18, %s25
      %p27 = scmp.eq.s32.totalorder %s26, 0
      %s29 = sadd.s32 %s28, 1
      %s30 = scalar_select %p27, %s28, %s29
      %p33 = pneg %p27
      %p34 = scmp.eq.s32.totalorder %s18, 3
      %p35 = por %p33, %p34
      %p36 = scmp.ne.s32.totalorder %s28, %s31
      %p37 = scmp.eq.s32.totalorder %s18, 0
      %p38 = por %p36, %p37
      %p39 = scmp.ne.s32.totalorder %s28, %s31
      %p40 = scmp.eq.s32.totalorder %s23, 3
      %p41 = por %p39, %p40
      %p42 = scmp.ne.s32.totalorder %s31, %s32
      %p43 = scmp.eq.s32.totalorder %s23, 0
      %p44 = por %p42, %p43
      %p45 = scmp.ne.s32.totalorder %s31, %s32
      %p46 = scmp.eq.s32.totalorder %s24, 3
      %p47 = por %p45, %p46
      %p49 = scmp.ne.s32.totalorder %s32, %s48
      %p50 = scmp.eq.s32.totalorder %s24, 0
      %p51 = por %p49, %p50
      %s53 = sadd.s32 %s52, 1
      %p56 = scmp.eq.s32.totalorder %s18, 3
      %p57 = scmp.ne.s32.totalorder %s52, %s54
      %p58 = scmp.eq.s32.totalorder %s18, 0
      %p59 = por %p57, %p58
      %p60 = scmp.ne.s32.totalorder %s52, %s54
      %p61 = scmp.eq.s32.totalorder %s23, 3
      %p62 = por %p60, %p61
      %p63 = scmp.ne.s32.totalorder %s54, %s55
      %p64 = scmp.eq.s32.totalorder %s23, 0
      %p65 = por %p63, %p64
      %p66 = scmp.ne.s32.totalorder %s54, %s55
      %p67 = scmp.eq.s32.totalorder %s24, 3
      %p68 = por %p66, %p67
      %p70 = scmp.ne.s32.totalorder %s55, %s69
      %p71 = scmp.eq.s32.totalorder %s24, 0
      %p72 = por %p70, %p71
      %s74 = sadd.s32 %s73, 1
      %p77 = scmp.eq.s32.totalorder %s18, 3
      %p78 = scmp.ne.s32.totalorder %s73, %s75
      %p79 = scmp.eq.s32.totalorder %s18, 0
      %p80 = por %p78, %p79
      %p81 = scmp.ne.s32.totalorder %s73, %s75
      %p82 = scmp.eq.s32.totalorder %s23, 3
      %p83 = por %p81, %p82
      %p84 = scmp.ne.s32.totalorder %s75, %s76
      %p85 = scmp.eq.s32.totalorder %s23, 0
      %p86 = por %p84, %p85
      %p87 = scmp.ne.s32.totalorder %s75, %s76
      %p88 = scmp.eq.s32.totalorder %s24, 3
      %p89 = por %p87, %p88
      %p91 = scmp.ne.s32.totalorder %s76, %s90
      %p92 = scmp.eq.s32.totalorder %s24, 0
      %p93 = por %p91, %p92
      %s95 = sadd.s32 %s94, 1
      %p98 = scmp.eq.s32.totalorder %s18, 3
      %p99 = scmp.ne.s32.totalorder %s94, %s96
      %p100 = scmp.eq.s32.totalorder %s18, 0
      %p101 = por %p99, %p100
      %p102 = scmp.ne.s32.totalorder %s94, %s96
      %p103 = scmp.eq.s32.totalorder %s23, 3
      %p104 = por %p102, %p103
      %p105 = scmp.ne.s32.totalorder %s96, %s97
      %p106 = scmp.eq.s32.totalorder %s23, 0
      %p107 = por %p105, %p106
      %p108 = scmp.ne.s32.totalorder %s96, %s97
      %p109 = scmp.eq.s32.totalorder %s24, 3
      %p110 = por %p108, %p109
      %p112 = scmp.ne.s32.totalorder %s97, %s111
      %p113 = scmp.eq.s32.totalorder %s24, 0
      %p114 = por %p112, %p113
      %s116 = sadd.s32 %s115, 1
      %p119 = scmp.eq.s32.totalorder %s18, 3
      %p120 = scmp.ne.s32.totalorder %s115, %s117
      %p121 = scmp.eq.s32.totalorder %s18, 0
      %p122 = por %p120, %p121
      %p123 = scmp.ne.s32.totalorder %s115, %s117
      %p124 = scmp.eq.s32.totalorder %s23, 3
      %p125 = por %p123, %p124
      %p126 = scmp.ne.s32.totalorder %s117, %s118
      %p127 = scmp.eq.s32.totalorder %s23, 0
      %p128 = por %p126, %p127
      %p129 = scmp.ne.s32.totalorder %s117, %s118
      %p130 = scmp.eq.s32.totalorder %s24, 3
      %p131 = por %p129, %p130
      %p133 = scmp.ne.s32.totalorder %s118, %s132
      %p134 = scmp.eq.s32.totalorder %s24, 0
      %p135 = por %p133, %p134
      %s136 = ssub.s32 %s18, %s25
      %p137 = scmp.eq.s32.totalorder %s136, 0
      %s139 = sadd.s32 %s138, 1
      %s140 = scalar_select %p137, %s138, %s139
      %p143 = pneg %p137
      %p144 = scmp.eq.s32.totalorder %s18, 3
      %p145 = por %p143, %p144
      %p146 = scmp.ne.s32.totalorder %s138, %s141
      %p147 = scmp.eq.s32.totalorder %s18, 0
      %p148 = por %p146, %p147
      %p149 = scmp.ne.s32.totalorder %s138, %s141
      %p150 = scmp.eq.s32.totalorder %s23, 3
      %p151 = por %p149, %p150
      %p152 = scmp.ne.s32.totalorder %s141, %s142
      %p153 = scmp.eq.s32.totalorder %s23, 0
      %p154 = por %p152, %p153
      %p155 = scmp.ne.s32.totalorder %s141, %s142
      %p156 = scmp.eq.s32.totalorder %s24, 3
      %p157 = por %p155, %p156
      %p159 = scmp.ne.s32.totalorder %s142, %s158
      %p160 = scmp.eq.s32.totalorder %s24, 0
      %p161 = por %p159, %p160
      %p162 = scmp.le.s32.totalorder 1, %s18
      %p163 = scmp.lt.s32.totalorder %s18, 5
      %p164 = pnand %p162, %p163
      %p165 = pneg %p164
      // Predicated region
      $region9: #{_mlp_pallas_call.1} parent=5 // pred_check
        _
      $region10: #{_mlp_pallas_call.1} parent=5 // pred_check_branch
        %167 = sbr.rel (%p164) target = $region12
      $region11: #{_mlp_pallas_call.1} parent=5 // pred_region
        %s168 = ssub.s32 %s18, 1
        // Predicated region
        $region13: #{_mlp_pallas_call.1} parent=11 // pred_check
          %p169 = pneg %p65
        $region14: #{_mlp_pallas_call.1} parent=11 // pred_check_branch
          %171 = sbr.rel (%p169) target = $region16
        $region15: #{_mlp_pallas_call.1} parent=11 // pred_region
          %s173 = ssub.s32 4096, 4096
          %174 = vsyncadd [#allocation6], %s173
          %s175 = sshll.u32 [#allocation5], 4
          %s176 = int_to_ptr.vmem [resolvable:$true] %s175
          %181 = dma.hbm_to_vmem [thread:$0]  %s1, 4096, %s176, [#allocation6], 128, 128, 8
        $region16: #{_mlp_pallas_call.1} parent=11 // pred_fallthru
          _
        // Predicated region
        $region17: #{_mlp_pallas_call.1} parent=11 // pred_check
          %p182 = pneg %p86
        $region18: #{_mlp_pallas_call.1} parent=11 // pred_check_branch
          %184 = sbr.rel (%p182) target = $region20
        $region19: #{_mlp_pallas_call.1} parent=11 // pred_region
          _
        $region20: #{_mlp_pallas_call.1} parent=11 // pred_fallthru
          _
        // Predicated region
        $region21: #{_mlp_pallas_call.1} parent=11 // pred_check
          %p185 = pneg %p107
        $region22: #{_mlp_pallas_call.1} parent=11 // pred_check_branch
          %187 = sbr.rel (%p185) target = $region24
        $region23: #{_mlp_pallas_call.1} parent=11 // pred_region
          %s189 = ssub.s32 4096, 4096
          %190 = vsyncadd [#allocation6], %s189
          %s191 = sshll.u32 [#allocation7], 4
          %s192 = int_to_ptr.vmem [resolvable:$true] %s191
          %197 = dma.hbm_to_vmem [thread:$0]  %s3, 4096, %s192, [#allocation6], 128, 128, 8
        $region24: #{_mlp_pallas_call.1} parent=11 // pred_fallthru
          _
        // Predicated region
        $region25: #{_mlp_pallas_call.1} parent=11 // pred_check
          %p198 = pneg %p128
        $region26: #{_mlp_pallas_call.1} parent=11 // pred_check_branch
          %200 = sbr.rel (%p198) target = $region28
        $region27: #{_mlp_pallas_call.1} parent=11 // pred_region
          _
        $region28: #{_mlp_pallas_call.1} parent=11 // pred_fallthru
          _
      $region12: #{_mlp_pallas_call.1} parent=5 // pred_fallthru
        _
      %p201 = scmp.lt.s32.totalorder %s18, 4
      // Predicated region
      $region29: #{_mlp_pallas_call.1} parent=5 // pred_check
        %p202 = pneg %p201
      $region30: #{_mlp_pallas_call.1} parent=5 // pred_check_branch
        %204 = sbr.rel (%p202) target = $region32
      $region31: #{_mlp_pallas_call.1} parent=5 // pred_region
        // Predicated region
        $region33: #{_mlp_pallas_call.1} parent=31 // pred_check
          %p205 = pneg %p38
        $region34: #{_mlp_pallas_call.1} parent=31 // pred_check_branch
          %207 = sbr.rel (%p205) target = $region36
        $region35: #{_mlp_pallas_call.1} parent=31 // pred_region
          %s208 = sand.u32 %s28, 1
          %s209 = scalar_lea.sflag [#allocation3], %s208
          %s210 = sand.u32 %s28, 1
          %s211 = smul.addr %s210, 128
          %s212 = scalar_lea.vmem [#allocation2], %s211
          %s213 = smul.u32 16, %s18
          %s215 = ssub.s32 2048, 2048
          %216 = vsyncadd %s209, %s215
          %s217 = smul.addr %s213, 2
          %s218 = smul.addr %s217, 64
          %s219 = scalar_lea.hbm %s0, %s218
          %s220 = sshll.u32 %s212, 4
          %s221 = int_to_ptr.vmem [resolvable:$true] %s220
          %226 = dma.hbm_to_vmem [thread:$0]  %s219, 2048, %s221, %s209, 128, 128, 8
        $region36: #{_mlp_pallas_call.1} parent=31 // pred_fallthru
          _
      $region32: #{_mlp_pallas_call.1} parent=5 // pred_fallthru
        _
      %p227 = scmp.le.s32.totalorder 1, %s18
      %p228 = scmp.lt.s32.totalorder %s18, 5
      %p229 = pnand %p227, %p228
      %p230 = pneg %p229
      // Predicated region
      $region37: #{_mlp_pallas_call.1} parent=5 // pred_check
        _
      $region38: #{_mlp_pallas_call.1} parent=5 // pred_check_branch
        %232 = sbr.rel (%p229) target = $region40
      $region39: #{_mlp_pallas_call.1} parent=5 // pred_region
        %s233 = ssub.s32 %s18, 1
        %s234 = sand.u32 %s31, 1
        %s235 = scalar_lea.sflag [#allocation3], %s234
        %s236 = sand.u32 %s31, 1
        %s237 = smul.addr %s236, 128
        %s238 = scalar_lea.vmem [#allocation2], %s237
        // Predicated region
        $region41: #{_mlp_pallas_call.1} parent=39 // pred_check
          %p239 = pneg %p44
        $region42: #{_mlp_pallas_call.1} parent=39 // pred_check_branch
          %241 = sbr.rel (%p239) target = $region44
        $region43: #{_mlp_pallas_call.1} parent=39 // pred_region
          %242 = dma.done %s235, 2048
        $region44: #{_mlp_pallas_call.1} parent=39 // pred_fallthru
          _
        // Predicated region
        $region45: #{_mlp_pallas_call.1} parent=39 // pred_check
          %p243 = pneg %p65
        $region46: #{_mlp_pallas_call.1} parent=39 // pred_check_branch
          %245 = sbr.rel (%p243) target = $region48
        $region47: #{_mlp_pallas_call.1} parent=39 // pred_region
          %246 = dma.done [#allocation6], 4096
        $region48: #{_mlp_pallas_call.1} parent=39 // pred_fallthru
          _
        // Predicated region
        $region49: #{_mlp_pallas_call.1} parent=39 // pred_check
          %p247 = pneg %p107
        $region50: #{_mlp_pallas_call.1} parent=39 // pred_check_branch
          %249 = sbr.rel (%p247) target = $region52
        $region51: #{_mlp_pallas_call.1} parent=39 // pred_region
          %250 = dma.done [#allocation6], 4096
        $region52: #{_mlp_pallas_call.1} parent=39 // pred_fallthru
          _
        %s251 = sand.u32 %s31, 1
        %s252 = scalar_lea.sflag [#allocation3], %s251
        %s253 = sand.u32 %s31, 1
        %s254 = smul.addr %s253, 128
        %s255 = scalar_lea.vmem [#allocation2], %s254
        %p256 = pneg %p44
        %p257 = pneg %p41
        %p258 = pneg %p65
        %p259 = pneg %p62
        %p260 = pneg %p86
        %p261 = pneg %p83
        %p262 = pneg %p107
        %p263 = pneg %p104
        %p264 = pneg %p128
        %p265 = pneg %p125
        %p266 = pneg %p154
        %p267 = pneg %p151
        %s268 = sand.u32 %s141, 1
        %s269 = scalar_lea.sflag [#allocation4], %s268
        %s270 = sand.u32 %s141, 1
        %s271 = smul.addr %s270, 128
        %s272 = scalar_lea.vmem [#allocation8], %s271
        %s273 = smul.u32 16, %s23
        %s274 = smul.u32 16, %s23
        %v275 = vld [vmem:[%s238] sm:$0xff]
        %v276 = vld [vmem:[%s238 + $0x8] sm:$0xff]
        %v277 = vld [vmem:[%s238 + $0x10] sm:$0xff]
        %v278 = vld [vmem:[%s238 + $0x18] sm:$0xff]
        %v279 = vld [vmem:[%s238 + $0x20] sm:$0xff]
        %v280 = vld [vmem:[%s238 + $0x28] sm:$0xff]
        %v281 = vld [vmem:[%s238 + $0x30] sm:$0xff]
        %v282 = vld [vmem:[%s238 + $0x38] sm:$0xff]
        %v283 = vld [vmem:[%s238 + $0x40] sm:$0xff]
        %v284 = vld [vmem:[%s238 + $0x48] sm:$0xff]
        %v285 = vld [vmem:[%s238 + $0x50] sm:$0xff]
        %v286 = vld [vmem:[%s238 + $0x58] sm:$0xff]
        %v287 = vld [vmem:[%s238 + $0x60] sm:$0xff]
        %v288 = vld [vmem:[%s238 + $0x68] sm:$0xff]
        %v289 = vld [vmem:[%s238 + $0x70] sm:$0xff]
        %v290 = vld [vmem:[%s238 + $0x78] sm:$0xff]
        %v291 = vld [vmem:[#allocation5] sm:$0xff]
        %v292 = vld [vmem:[#allocation5 + $0x8] sm:$0xff]
        %v293 = vld [vmem:[#allocation5 + $0x10] sm:$0xff]
        %v294 = vld [vmem:[#allocation5 + $0x18] sm:$0xff]
        %v295 = vld [vmem:[#allocation5 + $0x20] sm:$0xff]
        %v296 = vld [vmem:[#allocation5 + $0x28] sm:$0xff]
        %v297 = vld [vmem:[#allocation5 + $0x30] sm:$0xff]
        %v298 = vld [vmem:[#allocation5 + $0x38] sm:$0xff]
        %v299 = vld [vmem:[#allocation5 + $0x40] sm:$0xff]
        %v300 = vld [vmem:[#allocation5 + $0x48] sm:$0xff]
        %v301 = vld [vmem:[#allocation5 + $0x50] sm:$0xff]
        %v302 = vld [vmem:[#allocation5 + $0x58] sm:$0xff]
        %v303 = vld [vmem:[#allocation5 + $0x60] sm:$0xff]
        %v304 = vld [vmem:[#allocation5 + $0x68] sm:$0xff]
        %v305 = vld [vmem:[#allocation5 + $0x70] sm:$0xff]
        %v306 = vld [vmem:[#allocation5 + $0x78] sm:$0xff]
        %v307 = vld [vmem:[#allocation5 + $0x80] sm:$0xff]
        %v308 = vld [vmem:[#allocation5 + $0x88] sm:$0xff]
        %v309 = vld [vmem:[#allocation5 + $0x90] sm:$0xff]
        %v310 = vld [vmem:[#allocation5 + $0x98] sm:$0xff]
        %v311 = vld [vmem:[#allocation5 + $0xa0] sm:$0xff]
        %v312 = vld [vmem:[#allocation5 + $0xa8] sm:$0xff]
        %v313 = vld [vmem:[#allocation5 + $0xb0] sm:$0xff]
        %v314 = vld [vmem:[#allocation5 + $0xb8] sm:$0xff]
        %v315 = vld [vmem:[#allocation5 + $0xc0] sm:$0xff]
        %v316 = vld [vmem:[#allocation5 + $0xc8] sm:$0xff]
        %v317 = vld [vmem:[#allocation5 + $0xd0] sm:$0xff]
        %v318 = vld [vmem:[#allocation5 + $0xd8] sm:$0xff]
        %v319 = vld [vmem:[#allocation5 + $0xe0] sm:$0xff]
        %v320 = vld [vmem:[#allocation5 + $0xe8] sm:$0xff]
        %v321 = vld [vmem:[#allocation5 + $0xf0] sm:$0xff]
        %v322 = vld [vmem:[#allocation5 + $0xf8] sm:$0xff]
        %v323 = vld [vmem:[%s2] sm:$0x3]
        %v325 = vlaneseq
        %v326 = vshrl.u32 %v325, 7
        %v327 = vsub.s32 0, %v326
        %v328 = vrot.slane %v323, %v327
        %v329 = vlaneseq
        %v330 = vshrl.u32 %v329, 7
        %v331 = vsub.s32 1, %v330
        %v332 = vrot.slane %v323, %v331
        %v351 = vunpack.c.l.b16 %v275
        %v352 = vunpack.c.h.b16 %v275
        %v353 = vunpack.c.l.b16 %v276
        %v354 = vunpack.c.h.b16 %v276
        %v355 = vunpack.c.l.b16 %v277
        %v356 = vunpack.c.h.b16 %v277
        %v357 = vunpack.c.l.b16 %v278
        %v358 = vunpack.c.h.b16 %v278
        %v359 = vunpack.c.l.b16 %v279
        %v360 = vunpack.c.h.b16 %v279
        %v361 = vunpack.c.l.b16 %v280
        %v362 = vunpack.c.h.b16 %v280
        %v363 = vunpack.c.l.b16 %v281
        %v364 = vunpack.c.h.b16 %v281
        %v365 = vunpack.c.l.b16 %v282
        %v366 = vunpack.c.h.b16 %v282
        %v367 = vunpack.c.l.b16 %v283
        %v368 = vunpack.c.h.b16 %v283
        %v369 = vunpack.c.l.b16 %v284
        %v370 = vunpack.c.h.b16 %v284
        %v371 = vunpack.c.l.b16 %v285
        %v372 = vunpack.c.h.b16 %v285
        %v373 = vunpack.c.l.b16 %v286
        %v374 = vunpack.c.h.b16 %v286
        %v375 = vunpack.c.l.b16 %v287
        %v376 = vunpack.c.h.b16 %v287
        %v377 = vunpack.c.l.b16 %v288
        %v378 = vunpack.c.h.b16 %v288
        %v379 = vunpack.c.l.b16 %v289
        %v380 = vunpack.c.h.b16 %v289
        %v381 = vunpack.c.l.b16 %v290
        %v382 = vunpack.c.h.b16 %v290
        %v383 = vpack.c.b16 %v353, %v351
        %v384 = vpack.c.b16 %v354, %v352
        %v385 = vpack.c.b16 %v357, %v355
        %v386 = vpack.c.b16 %v358, %v356
        %v387 = vpack.c.b16 %v361, %v359
        %v388 = vpack.c.b16 %v362, %v360
        %v389 = vpack.c.b16 %v365, %v363
        %v390 = vpack.c.b16 %v366, %v364
        %v391 = vpack.c.b16 %v369, %v367
        %v392 = vpack.c.b16 %v370, %v368
        %v393 = vpack.c.b16 %v373, %v371
        %v394 = vpack.c.b16 %v374, %v372
        %v395 = vpack.c.b16 %v377, %v375
        %v396 = vpack.c.b16 %v378, %v376
        %v397 = vpack.c.b16 %v381, %v379
        %v398 = vpack.c.b16 %v382, %v380
        %v447 = vunpack.c.l.b16 %v291
        %v448 = vunpack.c.h.b16 %v291
        %v449 = vunpack.c.l.b16 %v292
        %v450 = vunpack.c.h.b16 %v292
        %v451 = vunpack.c.l.b16 %v293
        %v452 = vunpack.c.h.b16 %v293
        %v453 = vunpack.c.l.b16 %v294
        %v454 = vunpack.c.h.b16 %v294
        %v455 = vunpack.c.l.b16 %v295
        %v456 = vunpack.c.h.b16 %v295
        %v457 = vunpack.c.l.b16 %v296
        %v458 = vunpack.c.h.b16 %v296
        %v459 = vunpack.c.l.b16 %v297
        %v460 = vunpack.c.h.b16 %v297
        %v461 = vunpack.c.l.b16 %v298
        %v462 = vunpack.c.h.b16 %v298
        %v463 = vunpack.c.l.b16 %v299
        %v464 = vunpack.c.h.b16 %v299
        %v465 = vunpack.c.l.b16 %v300
        %v466 = vunpack.c.h.b16 %v300
        %v467 = vunpack.c.l.b16 %v301
        %v468 = vunpack.c.h.b16 %v301
        %v469 = vunpack.c.l.b16 %v302
        %v470 = vunpack.c.h.b16 %v302
        %v471 = vunpack.c.l.b16 %v303
        %v472 = vunpack.c.h.b16 %v303
        %v473 = vunpack.c.l.b16 %v304
        %v474 = vunpack.c.h.b16 %v304
        %v475 = vunpack.c.l.b16 %v305
        %v476 = vunpack.c.h.b16 %v305
        %v477 = vunpack.c.l.b16 %v306
        %v478 = vunpack.c.h.b16 %v306
        %v479 = vunpack.c.l.b16 %v307
        %v480 = vunpack.c.h.b16 %v307
        %v481 = vunpack.c.l.b16 %v308
        %v482 = vunpack.c.h.b16 %v308
        %v483 = vunpack.c.l.b16 %v309
        %v484 = vunpack.c.h.b16 %v309
        %v485 = vunpack.c.l.b16 %v310
        %v486 = vunpack.c.h.b16 %v310
        %v487 = vunpack.c.l.b16 %v311
        %v488 = vunpack.c.h.b16 %v311
        %v489 = vunpack.c.l.b16 %v312
        %v490 = vunpack.c.h.b16 %v312
        %v491 = vunpack.c.l.b16 %v313
        %v492 = vunpack.c.h.b16 %v313
        %v493 = vunpack.c.l.b16 %v314
        %v494 = vunpack.c.h.b16 %v314
        %v495 = vunpack.c.l.b16 %v315
        %v496 = vunpack.c.h.b16 %v315
        %v497 = vunpack.c.l.b16 %v316
        %v498 = vunpack.c.h.b16 %v316
        %v499 = vunpack.c.l.b16 %v317
        %v500 = vunpack.c.h.b16 %v317
        %v501 = vunpack.c.l.b16 %v318
        %v502 = vunpack.c.h.b16 %v318
        %v503 = vunpack.c.l.b16 %v319
        %v504 = vunpack.c.h.b16 %v319
        %v505 = vunpack.c.l.b16 %v320
        %v506 = vunpack.c.h.b16 %v320
        %v507 = vunpack.c.l.b16 %v321
        %v508 = vunpack.c.h.b16 %v321
        %v509 = vunpack.c.l.b16 %v322
        %v510 = vunpack.c.h.b16 %v322
        %v511 = vpack.c.b16 %v449, %v447
        %v512 = vpack.c.b16 %v450, %v448
        %v513 = vpack.c.b16 %v453, %v451
        %v514 = vpack.c.b16 %v454, %v452
        %v515 = vpack.c.b16 %v457, %v455
        %v516 = vpack.c.b16 %v458, %v456
        %v517 = vpack.c.b16 %v461, %v459
        %v518 = vpack.c.b16 %v462, %v460
        %v519 = vpack.c.b16 %v465, %v463
        %v520 = vpack.c.b16 %v466, %v464
        %v521 = vpack.c.b16 %v469, %v467
        %v522 = vpack.c.b16 %v470, %v468
        %v523 = vpack.c.b16 %v473, %v471
        %v524 = vpack.c.b16 %v474, %v472
        %v525 = vpack.c.b16 %v477, %v475
        %v526 = vpack.c.b16 %v478, %v476
        %v527 = vpack.c.b16 %v481, %v479
        %v528 = vpack.c.b16 %v482, %v480
        %v529 = vpack.c.b16 %v485, %v483
        %v530 = vpack.c.b16 %v486, %v484
        %v531 = vpack.c.b16 %v489, %v487
        %v532 = vpack.c.b16 %v490, %v488
        %v533 = vpack.c.b16 %v493, %v491
        %v534 = vpack.c.b16 %v494, %v492
        %v535 = vpack.c.b16 %v497, %v495
        %v536 = vpack.c.b16 %v498, %v496
        %v537 = vpack.c.b16 %v501, %v499
        %v538 = vpack.c.b16 %v502, %v500
        %v539 = vpack.c.b16 %v505, %v503
        %v540 = vpack.c.b16 %v506, %v504
        %v541 = vpack.c.b16 %v509, %v507
        %v542 = vpack.c.b16 %v510, %v508
        %575 = vmatprep.subr.bf16.mxu0 %v526
        %576 = vmatpush1.bf16.msra.mxu0 %v525
        %577 = vmatprep.subr.bf16.mxu0 %v524
        %578 = vmatpush1.bf16.msra.mxu0 %v523
        %579 = vmatprep.subr.bf16.mxu0 %v522
        %580 = vmatpush1.bf16.msra.mxu0 %v521
        %581 = vmatprep.subr.bf16.mxu0 %v520
        %582 = vmatpush1.bf16.msra.mxu0 %v519
        %583 = vmatprep.subr.bf16.mxu0 %v518
        %584 = vmatpush1.bf16.msra.mxu0 %v517
        %585 = vmatprep.subr.bf16.mxu0 %v516
        %586 = vmatpush1.bf16.msra.mxu0 %v515
        %587 = vmatprep.subr.bf16.mxu0 %v514
        %588 = vmatpush1.bf16.msra.mxu0 %v513
        %589 = vmatprep.subr.bf16.mxu0 %v512
        %590 = vmatpush1.bf16.msra.mxu0 %v511
        %591 = vmatprep.subr.bf16.mxu0 %v542
        %592 = vmatpush2.bf16.msra.mxu0 %v541
        %593 = vmatprep.subr.bf16.mxu0 %v540
        %594 = vmatpush2.bf16.msra.mxu0 %v539
        %595 = vmatprep.subr.bf16.mxu0 %v538
        %596 = vmatpush2.bf16.msra.mxu0 %v537
        %597 = vmatprep.subr.bf16.mxu0 %v536
        %598 = vmatpush2.bf16.msra.mxu0 %v535
        %599 = vmatprep.subr.bf16.mxu0 %v534
        %600 = vmatpush2.bf16.msra.mxu0 %v533
        %601 = vmatprep.subr.bf16.mxu0 %v532
        %602 = vmatpush2.bf16.msra.mxu0 %v531
        %603 = vmatprep.subr.bf16.mxu0 %v530
        %604 = vmatpush2.bf16.msra.mxu0 %v529
        %605 = vmatprep.subr.bf16.mxu0 %v528
        %606 = vmatpush2.bf16.msra.mxu0 %v527
        %607 = vmatprep.mubr.bf16.mxu0 %v384
        %608 = vmatmul.mubr.bf16.gmra.mxu0 %v383
        %v609 = vpop.f32.mrf.mxu0
        %v610 = vadd.f32 %v328, %v609
        %v611 = vpop.f32.mrf.mxu0
        %v612 = vadd.f32 %v332, %v611
        %v613 = vpop.f32.mrf.mxu0
        %v614 = vadd.f32 %v328, %v613
        %v615 = vpop.f32.mrf.mxu0
        %v616 = vadd.f32 %v332, %v615
        %617 = vmatprep.mubr.bf16.mxu0 %v386
        %618 = vmatmul.mubr.bf16.gmra.mxu0 %v385
        %v619 = vpop.f32.mrf.mxu0
        %v620 = vadd.f32 %v328, %v619
        %v621 = vpop.f32.mrf.mxu0
        %v622 = vadd.f32 %v332, %v621
        %v623 = vpop.f32.mrf.mxu0
        %v624 = vadd.f32 %v328, %v623
        %v625 = vpop.f32.mrf.mxu0
        %v626 = vadd.f32 %v332, %v625
        %627 = vmatprep.mubr.bf16.mxu0 %v388
        %628 = vmatmul.mubr.bf16.gmra.mxu0 %v387
        %v629 = vpop.f32.mrf.mxu0
        %v630 = vadd.f32 %v328, %v629
        %v631 = vpop.f32.mrf.mxu0
        %v632 = vadd.f32 %v332, %v631
        %v633 = vpop.f32.mrf.mxu0
        %v634 = vadd.f32 %v328, %v633
        %v635 = vpop.f32.mrf.mxu0
        %v636 = vadd.f32 %v332, %v635
        %637 = vmatprep.mubr.bf16.mxu0 %v390
        %638 = vmatmul.mubr.bf16.gmra.mxu0 %v389
        %v639 = vpop.f32.mrf.mxu0
        %v640 = vadd.f32 %v328, %v639
        %v641 = vpop.f32.mrf.mxu0
        %v642 = vadd.f32 %v332, %v641
        %v643 = vpop.f32.mrf.mxu0
        %v644 = vadd.f32 %v328, %v643
        %v645 = vpop.f32.mrf.mxu0
        %v646 = vadd.f32 %v332, %v645
        %647 = vmatprep.mubr.bf16.mxu0 %v392
        %648 = vmatmul.mubr.bf16.gmra.mxu0 %v391
        %v649 = vpop.f32.mrf.mxu0
        %v650 = vadd.f32 %v328, %v649
        %v651 = vpop.f32.mrf.mxu0
        %v652 = vadd.f32 %v332, %v651
        %v653 = vpop.f32.mrf.mxu0
        %v654 = vadd.f32 %v328, %v653
        %v655 = vpop.f32.mrf.mxu0
        %v656 = vadd.f32 %v332, %v655
        %657 = vmatprep.mubr.bf16.mxu0 %v394
        %658 = vmatmul.mubr.bf16.gmra.mxu0 %v393
        %v659 = vpop.f32.mrf.mxu0
        %v660 = vadd.f32 %v328, %v659
        %v661 = vpop.f32.mrf.mxu0
        %v662 = vadd.f32 %v332, %v661
        %v663 = vpop.f32.mrf.mxu0
        %v664 = vadd.f32 %v328, %v663
        %v665 = vpop.f32.mrf.mxu0
        %v666 = vadd.f32 %v332, %v665
        %667 = vmatprep.mubr.bf16.mxu0 %v396
        %668 = vmatmul.mubr.bf16.gmra.mxu0 %v395
        %v669 = vpop.f32.mrf.mxu0
        %v670 = vadd.f32 %v328, %v669
        %v671 = vpop.f32.mrf.mxu0
        %v672 = vadd.f32 %v332, %v671
        %v673 = vpop.f32.mrf.mxu0
        %v674 = vadd.f32 %v328, %v673
        %v675 = vpop.f32.mrf.mxu0
        %v676 = vadd.f32 %v332, %v675
        %677 = vmatprep.mubr.bf16.mxu0 %v398
        %678 = vmatmul.mubr.bf16.gmra.mxu0 %v397
        %v679 = vpop.f32.mrf.mxu0
        %v680 = vadd.f32 %v328, %v679
        %v681 = vpop.f32.mrf.mxu0
        %v682 = vadd.f32 %v332, %v681
        %v683 = vpop.f32.mrf.mxu0
        %v684 = vadd.f32 %v328, %v683
        %v685 = vpop.f32.mrf.mxu0
        %v686 = vadd.f32 %v332, %v685
        %687 = vdwg.mxu0
        %v688 = vmax.f32 %v610, 0.0
        %v689 = vmax.f32 %v612, 0.0
        %v690 = vmax.f32 %v614, 0.0
        %v691 = vmax.f32 %v616, 0.0
        %v692 = vmax.f32 %v620, 0.0
        %v693 = vmax.f32 %v622, 0.0
        %v694 = vmax.f32 %v624, 0.0
        %v695 = vmax.f32 %v626, 0.0
        %v696 = vmax.f32 %v630, 0.0
        %v697 = vmax.f32 %v632, 0.0
        %v698 = vmax.f32 %v634, 0.0
        %v699 = vmax.f32 %v636, 0.0
        %v700 = vmax.f32 %v640, 0.0
        %v701 = vmax.f32 %v642, 0.0
        %v702 = vmax.f32 %v644, 0.0
        %v703 = vmax.f32 %v646, 0.0
        %v704 = vmax.f32 %v650, 0.0
        %v705 = vmax.f32 %v652, 0.0
        %v706 = vmax.f32 %v654, 0.0
        %v707 = vmax.f32 %v656, 0.0
        %v708 = vmax.f32 %v660, 0.0
        %v709 = vmax.f32 %v662, 0.0
        %v710 = vmax.f32 %v664, 0.0
        %v711 = vmax.f32 %v666, 0.0
        %v712 = vmax.f32 %v670, 0.0
        %v713 = vmax.f32 %v672, 0.0
        %v714 = vmax.f32 %v674, 0.0
        %v715 = vmax.f32 %v676, 0.0
        %v716 = vmax.f32 %v680, 0.0
        %v717 = vmax.f32 %v682, 0.0
        %v718 = vmax.f32 %v684, 0.0
        %v719 = vmax.f32 %v686, 0.0
        %v720 = vpack.c.bf16 %v690, %v688
        %v721 = vpack.c.bf16 %v691, %v689
        %v722 = vpack.c.bf16 %v694, %v692
        %v723 = vpack.c.bf16 %v695, %v693
        %v724 = vpack.c.bf16 %v698, %v696
        %v725 = vpack.c.bf16 %v699, %v697
        %v726 = vpack.c.bf16 %v702, %v700
        %v727 = vpack.c.bf16 %v703, %v701
        %v728 = vpack.c.bf16 %v706, %v704
        %v729 = vpack.c.bf16 %v707, %v705
        %v730 = vpack.c.bf16 %v710, %v708
        %v731 = vpack.c.bf16 %v711, %v709
        %v732 = vpack.c.bf16 %v714, %v712
        %v733 = vpack.c.bf16 %v715, %v713
        %v734 = vpack.c.bf16 %v718, %v716
        %v735 = vpack.c.bf16 %v719, %v717
        %v736 = vld [vmem:[#allocation7] sm:$0xff]
        %v737 = vld [vmem:[#allocation7 + $0x8] sm:$0xff]
        %v738 = vld [vmem:[#allocation7 + $0x10] sm:$0xff]
        %v739 = vld [vmem:[#allocation7 + $0x18] sm:$0xff]
        %v740 = vld [vmem:[#allocation7 + $0x20] sm:$0xff]
        %v741 = vld [vmem:[#allocation7 + $0x28] sm:$0xff]
        %v742 = vld [vmem:[#allocation7 + $0x30] sm:$0xff]
        %v743 = vld [vmem:[#allocation7 + $0x38] sm:$0xff]
        %v744 = vld [vmem:[#allocation7 + $0x40] sm:$0xff]
        %v745 = vld [vmem:[#allocation7 + $0x48] sm:$0xff]
        %v746 = vld [vmem:[#allocation7 + $0x50] sm:$0xff]
        %v747 = vld [vmem:[#allocation7 + $0x58] sm:$0xff]
        %v748 = vld [vmem:[#allocation7 + $0x60] sm:$0xff]
        %v749 = vld [vmem:[#allocation7 + $0x68] sm:$0xff]
        %v750 = vld [vmem:[#allocation7 + $0x70] sm:$0xff]
        %v751 = vld [vmem:[#allocation7 + $0x78] sm:$0xff]
        %v752 = vld [vmem:[#allocation7 + $0x80] sm:$0xff]
        %v753 = vld [vmem:[#allocation7 + $0x88] sm:$0xff]
        %v754 = vld [vmem:[#allocation7 + $0x90] sm:$0xff]
        %v755 = vld [vmem:[#allocation7 + $0x98] sm:$0xff]
        %v756 = vld [vmem:[#allocation7 + $0xa0] sm:$0xff]
        %v757 = vld [vmem:[#allocation7 + $0xa8] sm:$0xff]
        %v758 = vld [vmem:[#allocation7 + $0xb0] sm:$0xff]
        %v759 = vld [vmem:[#allocation7 + $0xb8] sm:$0xff]
        %v760 = vld [vmem:[#allocation7 + $0xc0] sm:$0xff]
        %v761 = vld [vmem:[#allocation7 + $0xc8] sm:$0xff]
        %v762 = vld [vmem:[#allocation7 + $0xd0] sm:$0xff]
        %v763 = vld [vmem:[#allocation7 + $0xd8] sm:$0xff]
        %v764 = vld [vmem:[#allocation7 + $0xe0] sm:$0xff]
        %v765 = vld [vmem:[#allocation7 + $0xe8] sm:$0xff]
        %v766 = vld [vmem:[#allocation7 + $0xf0] sm:$0xff]
        %v767 = vld [vmem:[#allocation7 + $0xf8] sm:$0xff]
        %v768 = vld [vmem:[%s4] sm:$0x3]
        %v770 = vlaneseq
        %v771 = vshrl.u32 %v770, 7
        %v772 = vsub.s32 0, %v771
        %v773 = vrot.slane %v768, %v772
        %v774 = vlaneseq
        %v775 = vshrl.u32 %v774, 7
        %v776 = vsub.s32 1, %v775
        %v777 = vrot.slane %v768, %v776
        %v812 = vunpack.c.l.b16 %v736
        %v813 = vunpack.c.h.b16 %v736
        %v814 = vunpack.c.l.b16 %v737
        %v815 = vunpack.c.h.b16 %v737
        %v816 = vunpack.c.l.b16 %v738
        %v817 = vunpack.c.h.b16 %v738
        %v818 = vunpack.c.l.b16 %v739
        %v819 = vunpack.c.h.b16 %v739
        %v820 = vunpack.c.l.b16 %v740
        %v821 = vunpack.c.h.b16 %v740
        %v822 = vunpack.c.l.b16 %v741
        %v823 = vunpack.c.h.b16 %v741
        %v824 = vunpack.c.l.b16 %v742
        %v825 = vunpack.c.h.b16 %v742
        %v826 = vunpack.c.l.b16 %v743
        %v827 = vunpack.c.h.b16 %v743
        %v828 = vunpack.c.l.b16 %v744
        %v829 = vunpack.c.h.b16 %v744
        %v830 = vunpack.c.l.b16 %v745
        %v831 = vunpack.c.h.b16 %v745
        %v832 = vunpack.c.l.b16 %v746
        %v833 = vunpack.c.h.b16 %v746
        %v834 = vunpack.c.l.b16 %v747
        %v835 = vunpack.c.h.b16 %v747
        %v836 = vunpack.c.l.b16 %v748
        %v837 = vunpack.c.h.b16 %v748
        %v838 = vunpack.c.l.b16 %v749
        %v839 = vunpack.c.h.b16 %v749
        %v840 = vunpack.c.l.b16 %v750
        %v841 = vunpack.c.h.b16 %v750
        %v842 = vunpack.c.l.b16 %v751
        %v843 = vunpack.c.h.b16 %v751
        %v844 = vunpack.c.l.b16 %v752
        %v845 = vunpack.c.h.b16 %v752
        %v846 = vunpack.c.l.b16 %v753
        %v847 = vunpack.c.h.b16 %v753
        %v848 = vunpack.c.l.b16 %v754
        %v849 = vunpack.c.h.b16 %v754
        %v850 = vunpack.c.l.b16 %v755
        %v851 = vunpack.c.h.b16 %v755
        %v852 = vunpack.c.l.b16 %v756
        %v853 = vunpack.c.h.b16 %v756
        %v854 = vunpack.c.l.b16 %v757
        %v855 = vunpack.c.h.b16 %v757
        %v856 = vunpack.c.l.b16 %v758
        %v857 = vunpack.c.h.b16 %v758
        %v858 = vunpack.c.l.b16 %v759
        %v859 = vunpack.c.h.b16 %v759
        %v860 = vunpack.c.l.b16 %v760
        %v861 = vunpack.c.h.b16 %v760
        %v862 = vunpack.c.l.b16 %v761
        %v863 = vunpack.c.h.b16 %v761
        %v864 = vunpack.c.l.b16 %v762
        %v865 = vunpack.c.h.b16 %v762
        %v866 = vunpack.c.l.b16 %v763
        %v867 = vunpack.c.h.b16 %v763
        %v868 = vunpack.c.l.b16 %v764
        %v869 = vunpack.c.h.b16 %v764
        %v870 = vunpack.c.l.b16 %v765
        %v871 = vunpack.c.h.b16 %v765
        %v872 = vunpack.c.l.b16 %v766
        %v873 = vunpack.c.h.b16 %v766
        %v874 = vunpack.c.l.b16 %v767
        %v875 = vunpack.c.h.b16 %v767
        %v876 = vpack.c.b16 %v814, %v812
        %v877 = vpack.c.b16 %v815, %v813
        %v878 = vpack.c.b16 %v818, %v816
        %v879 = vpack.c.b16 %v819, %v817
        %v880 = vpack.c.b16 %v822, %v820
        %v881 = vpack.c.b16 %v823, %v821
        %v882 = vpack.c.b16 %v826, %v824
        %v883 = vpack.c.b16 %v827, %v825
        %v884 = vpack.c.b16 %v830, %v828
        %v885 = vpack.c.b16 %v831, %v829
        %v886 = vpack.c.b16 %v834, %v832
        %v887 = vpack.c.b16 %v835, %v833
        %v888 = vpack.c.b16 %v838, %v836
        %v889 = vpack.c.b16 %v839, %v837
        %v890 = vpack.c.b16 %v842, %v840
        %v891 = vpack.c.b16 %v843, %v841
        %v892 = vpack.c.b16 %v846, %v844
        %v893 = vpack.c.b16 %v847, %v845
        %v894 = vpack.c.b16 %v850, %v848
        %v895 = vpack.c.b16 %v851, %v849
        %v896 = vpack.c.b16 %v854, %v852
        %v897 = vpack.c.b16 %v855, %v853
        %v898 = vpack.c.b16 %v858, %v856
        %v899 = vpack.c.b16 %v859, %v857
        %v900 = vpack.c.b16 %v862, %v860
        %v901 = vpack.c.b16 %v863, %v861
        %v902 = vpack.c.b16 %v866, %v864
        %v903 = vpack.c.b16 %v867, %v865
        %v904 = vpack.c.b16 %v870, %v868
        %v905 = vpack.c.b16 %v871, %v869
        %v906 = vpack.c.b16 %v874, %v872
        %v907 = vpack.c.b16 %v875, %v873
        %940 = vmatprep.subr.bf16.mxu0 %v891
        %941 = vmatpush1.bf16.msra.mxu0 %v890
        %942 = vmatprep.subr.bf16.mxu0 %v889
        %943 = vmatpush1.bf16.msra.mxu0 %v888
        %944 = vmatprep.subr.bf16.mxu0 %v887
        %945 = vmatpush1.bf16.msra.mxu0 %v886
        %946 = vmatprep.subr.bf16.mxu0 %v885
        %947 = vmatpush1.bf16.msra.mxu0 %v884
        %948 = vmatprep.subr.bf16.mxu0 %v883
        %949 = vmatpush1.bf16.msra.mxu0 %v882
        %950 = vmatprep.subr.bf16.mxu0 %v881
        %951 = vmatpush1.bf16.msra.mxu0 %v880
        %952 = vmatprep.subr.bf16.mxu0 %v879
        %953 = vmatpush1.bf16.msra.mxu0 %v878
        %954 = vmatprep.subr.bf16.mxu0 %v877
        %955 = vmatpush1.bf16.msra.mxu0 %v876
        %956 = vmatprep.subr.bf16.mxu0 %v907
        %957 = vmatpush2.bf16.msra.mxu0 %v906
        %958 = vmatprep.subr.bf16.mxu0 %v905
        %959 = vmatpush2.bf16.msra.mxu0 %v904
        %960 = vmatprep.subr.bf16.mxu0 %v903
        %961 = vmatpush2.bf16.msra.mxu0 %v902
        %962 = vmatprep.subr.bf16.mxu0 %v901
        %963 = vmatpush2.bf16.msra.mxu0 %v900
        %964 = vmatprep.subr.bf16.mxu0 %v899
        %965 = vmatpush2.bf16.msra.mxu0 %v898
        %966 = vmatprep.subr.bf16.mxu0 %v897
        %967 = vmatpush2.bf16.msra.mxu0 %v896
        %968 = vmatprep.subr.bf16.mxu0 %v895
        %969 = vmatpush2.bf16.msra.mxu0 %v894
        %970 = vmatprep.subr.bf16.mxu0 %v893
        %971 = vmatpush2.bf16.msra.mxu0 %v892
        %972 = vmatprep.mubr.bf16.mxu0 %v721
        %973 = vmatmul.mubr.bf16.gmra.mxu0 %v720
        %v974 = vpop.f32.mrf.mxu0
        %v975 = vadd.f32 %v773, %v974
        %v976 = vpop.f32.mrf.mxu0
        %v977 = vadd.f32 %v777, %v976
        %v978 = vpop.f32.mrf.mxu0
        %v979 = vadd.f32 %v773, %v978
        %v980 = vpop.f32.mrf.mxu0
        %v981 = vadd.f32 %v777, %v980
        %982 = vmatprep.mubr.bf16.mxu0 %v723
        %983 = vmatmul.mubr.bf16.gmra.mxu0 %v722
        %v984 = vpop.f32.mrf.mxu0
        %v985 = vadd.f32 %v773, %v984
        %v986 = vpop.f32.mrf.mxu0
        %v987 = vadd.f32 %v777, %v986
        %v988 = vpop.f32.mrf.mxu0
        %v989 = vadd.f32 %v773, %v988
        %v990 = vpop.f32.mrf.mxu0
        %v991 = vadd.f32 %v777, %v990
        %992 = vmatprep.mubr.bf16.mxu0 %v725
        %993 = vmatmul.mubr.bf16.gmra.mxu0 %v724
        %v994 = vpop.f32.mrf.mxu0
        %v995 = vadd.f32 %v773, %v994
        %v996 = vpop.f32.mrf.mxu0
        %v997 = vadd.f32 %v777, %v996
        %v998 = vpop.f32.mrf.mxu0
        %v999 = vadd.f32 %v773, %v998
        %v1000 = vpop.f32.mrf.mxu0
        %v1001 = vadd.f32 %v777, %v1000
        %1002 = vmatprep.mubr.bf16.mxu0 %v727
        %1003 = vmatmul.mubr.bf16.gmra.mxu0 %v726
        %v1004 = vpop.f32.mrf.mxu0
        %v1005 = vadd.f32 %v773, %v1004
        %v1006 = vpop.f32.mrf.mxu0
        %v1007 = vadd.f32 %v777, %v1006
        %v1008 = vpop.f32.mrf.mxu0
        %v1009 = vadd.f32 %v773, %v1008
        %v1010 = vpop.f32.mrf.mxu0
        %v1011 = vadd.f32 %v777, %v1010
        %1012 = vmatprep.mubr.bf16.mxu0 %v729
        %1013 = vmatmul.mubr.bf16.gmra.mxu0 %v728
        %v1014 = vpop.f32.mrf.mxu0
        %v1015 = vadd.f32 %v773, %v1014
        %v1016 = vpop.f32.mrf.mxu0
        %v1017 = vadd.f32 %v777, %v1016
        %v1018 = vpop.f32.mrf.mxu0
        %v1019 = vadd.f32 %v773, %v1018
        %v1020 = vpop.f32.mrf.mxu0
        %v1021 = vadd.f32 %v777, %v1020
        %1022 = vmatprep.mubr.bf16.mxu0 %v731
        %1023 = vmatmul.mubr.bf16.gmra.mxu0 %v730
        %v1024 = vpop.f32.mrf.mxu0
        %v1025 = vadd.f32 %v773, %v1024
        %v1026 = vpop.f32.mrf.mxu0
        %v1027 = vadd.f32 %v777, %v1026
        %v1028 = vpop.f32.mrf.mxu0
        %v1029 = vadd.f32 %v773, %v1028
        %v1030 = vpop.f32.mrf.mxu0
        %v1031 = vadd.f32 %v777, %v1030
        %1032 = vmatprep.mubr.bf16.mxu0 %v733
        %1033 = vmatmul.mubr.bf16.gmra.mxu0 %v732
        %v1034 = vpop.f32.mrf.mxu0
        %v1035 = vadd.f32 %v773, %v1034
        %v1036 = vpop.f32.mrf.mxu0
        %v1037 = vadd.f32 %v777, %v1036
        %v1038 = vpop.f32.mrf.mxu0
        %v1039 = vadd.f32 %v773, %v1038
        %v1040 = vpop.f32.mrf.mxu0
        %v1041 = vadd.f32 %v777, %v1040
        %1042 = vmatprep.mubr.bf16.mxu0 %v735
        %1043 = vmatmul.mubr.bf16.gmra.mxu0 %v734
        %v1044 = vpop.f32.mrf.mxu0
        %v1045 = vadd.f32 %v773, %v1044
        %v1046 = vpop.f32.mrf.mxu0
        %v1047 = vadd.f32 %v777, %v1046
        %v1048 = vpop.f32.mrf.mxu0
        %v1049 = vadd.f32 %v773, %v1048
        %v1050 = vpop.f32.mrf.mxu0
        %v1051 = vadd.f32 %v777, %v1050
        %1052 = vdwg.mxu0
        %v1053 = vpack.c.bf16 %v979, %v975
        %v1054 = vpack.c.bf16 %v981, %v977
        %v1055 = vpack.c.bf16 %v989, %v985
        %v1056 = vpack.c.bf16 %v991, %v987
        %v1057 = vpack.c.bf16 %v999, %v995
        %v1058 = vpack.c.bf16 %v1001, %v997
        %v1059 = vpack.c.bf16 %v1009, %v1005
        %v1060 = vpack.c.bf16 %v1011, %v1007
        %v1061 = vpack.c.bf16 %v1019, %v1015
        %v1062 = vpack.c.bf16 %v1021, %v1017
        %v1063 = vpack.c.bf16 %v1029, %v1025
        %v1064 = vpack.c.bf16 %v1031, %v1027
        %v1065 = vpack.c.bf16 %v1039, %v1035
        %v1066 = vpack.c.bf16 %v1041, %v1037
        %v1067 = vpack.c.bf16 %v1049, %v1045
        %v1068 = vpack.c.bf16 %v1051, %v1047
        %v1085 = vunpack.c.l.b16 %v1053
        %v1086 = vunpack.c.l.b16 %v1054
        %v1087 = vunpack.c.h.b16 %v1053
        %v1088 = vunpack.c.h.b16 %v1054
        %v1089 = vunpack.c.l.b16 %v1055
        %v1090 = vunpack.c.l.b16 %v1056
        %v1091 = vunpack.c.h.b16 %v1055
        %v1092 = vunpack.c.h.b16 %v1056
        %v1093 = vunpack.c.l.b16 %v1057
        %v1094 = vunpack.c.l.b16 %v1058
        %v1095 = vunpack.c.h.b16 %v1057
        %v1096 = vunpack.c.h.b16 %v1058
        %v1097 = vunpack.c.l.b16 %v1059
        %v1098 = vunpack.c.l.b16 %v1060
        %v1099 = vunpack.c.h.b16 %v1059
        %v1100 = vunpack.c.h.b16 %v1060
        %v1101 = vunpack.c.l.b16 %v1061
        %v1102 = vunpack.c.l.b16 %v1062
        %v1103 = vunpack.c.h.b16 %v1061
        %v1104 = vunpack.c.h.b16 %v1062
        %v1105 = vunpack.c.l.b16 %v1063
        %v1106 = vunpack.c.l.b16 %v1064
        %v1107 = vunpack.c.h.b16 %v1063
        %v1108 = vunpack.c.h.b16 %v1064
        %v1109 = vunpack.c.l.b16 %v1065
        %v1110 = vunpack.c.l.b16 %v1066
        %v1111 = vunpack.c.h.b16 %v1065
        %v1112 = vunpack.c.h.b16 %v1066
        %v1113 = vunpack.c.l.b16 %v1067
        %v1114 = vunpack.c.l.b16 %v1068
        %v1115 = vunpack.c.h.b16 %v1067
        %v1116 = vunpack.c.h.b16 %v1068
        %v1117 = vpack.c.b16 %v1086, %v1085
        %v1118 = vpack.c.b16 %v1088, %v1087
        %v1119 = vpack.c.b16 %v1090, %v1089
        %v1120 = vpack.c.b16 %v1092, %v1091
        %v1121 = vpack.c.b16 %v1094, %v1093
        %v1122 = vpack.c.b16 %v1096, %v1095
        %v1123 = vpack.c.b16 %v1098, %v1097
        %v1124 = vpack.c.b16 %v1100, %v1099
        %v1125 = vpack.c.b16 %v1102, %v1101
        %v1126 = vpack.c.b16 %v1104, %v1103
        %v1127 = vpack.c.b16 %v1106, %v1105
        %v1128 = vpack.c.b16 %v1108, %v1107
        %v1129 = vpack.c.b16 %v1110, %v1109
        %v1130 = vpack.c.b16 %v1112, %v1111
        %v1131 = vpack.c.b16 %v1114, %v1113
        %v1132 = vpack.c.b16 %v1116, %v1115
        %1149 = vst [vmem:[%s272] sm:$0xff] %v1117
        %1150 = vst [vmem:[%s272 + $0x8] sm:$0xff] %v1118
        %1151 = vst [vmem:[%s272 + $0x10] sm:$0xff] %v1119
        %1152 = vst [vmem:[%s272 + $0x18] sm:$0xff] %v1120
        %1153 = vst [vmem:[%s272 + $0x20] sm:$0xff] %v1121
        %1154 = vst [vmem:[%s272 + $0x28] sm:$0xff] %v1122
        %1155 = vst [vmem:[%s272 + $0x30] sm:$0xff] %v1123
        %1156 = vst [vmem:[%s272 + $0x38] sm:$0xff] %v1124
        %1157 = vst [vmem:[%s272 + $0x40] sm:$0xff] %v1125
        %1158 = vst [vmem:[%s272 + $0x48] sm:$0xff] %v1126
        %1159 = vst [vmem:[%s272 + $0x50] sm:$0xff] %v1127
        %1160 = vst [vmem:[%s272 + $0x58] sm:$0xff] %v1128
        %1161 = vst [vmem:[%s272 + $0x60] sm:$0xff] %v1129
        %1162 = vst [vmem:[%s272 + $0x68] sm:$0xff] %v1130
        %1163 = vst [vmem:[%s272 + $0x70] sm:$0xff] %v1131
        %1164 = vst [vmem:[%s272 + $0x78] sm:$0xff] %v1132
        %s1165 = sand.u32 %s141, 1
        %s1166 = scalar_lea.sflag [#allocation4], %s1165
        %s1167 = sand.u32 %s141, 1
        %s1168 = smul.addr %s1167, 128
        %s1169 = scalar_lea.vmem [#allocation8], %s1168
        // Predicated region
        $region53: #{_mlp_pallas_call.1} parent=39 // pred_check
          %p1170 = pneg %p151
        $region54: #{_mlp_pallas_call.1} parent=39 // pred_check_branch
          %1172 = sbr.rel (%p1170) target = $region56
        $region55: #{_mlp_pallas_call.1} parent=39 // pred_region
          %s1173 = smul.u32 16, %s23
          %s1175 = ssub.s32 2048, 2048
          %1176 = vsyncadd %s1166, %s1175
          %s1177 = smul.addr %s1173, 2
          %s1178 = smul.addr %s1177, 64
          %s1179 = scalar_lea.hbm %s5, %s1178
          %s1180 = sshll.u32 %s1169, 4
          %s1181 = int_to_ptr.vmem [resolvable:$true] %s1180
          %1186 = dma.vmem_to_hbm [thread:$0]  %s1181, 2048, %s1179, %s1166, 128, 128, 8
        $region56: #{_mlp_pallas_call.1} parent=39 // pred_fallthru
          _
      $region40: #{_mlp_pallas_call.1} parent=5 // pred_fallthru
        _
      %p1187 = scmp.le.s32.totalorder 2, %s18
      // Predicated region
      $region57: #{_mlp_pallas_call.1} parent=5 // pred_check
        %p1188 = pneg %p1187
      $region58: #{_mlp_pallas_call.1} parent=5 // pred_check_branch
        %1190 = sbr.rel (%p1188) target = $region60
      $region59: #{_mlp_pallas_call.1} parent=5 // pred_region
        %s1191 = ssub.s32 %s18, 2
        // Predicated region
        $region61: #{_mlp_pallas_call.1} parent=59 // pred_check
          %p1192 = pneg %p157
        $region62: #{_mlp_pallas_call.1} parent=59 // pred_check_branch
          %1194 = sbr.rel (%p1192) target = $region64
        $region63: #{_mlp_pallas_call.1} parent=59 // pred_region
          %s1195 = sand.u32 %s142, 1
          %s1196 = scalar_lea.sflag [#allocation4], %s1195
          %s1197 = sand.u32 %s142, 1
          %s1198 = smul.addr %s1197, 128
          %s1199 = scalar_lea.vmem [#allocation8], %s1198
          %1200 = dma.done %s1196, 2048
        $region64: #{_mlp_pallas_call.1} parent=59 // pred_fallthru
          _
      $region60: #{_mlp_pallas_call.1} parent=5 // pred_fallthru
        _
    $region6: #{_mlp_pallas_call.1} parent=1 // loop_footer
      %s22 = sadd.s32 1, %s18
    $region7: #{_mlp_pallas_call.1} parent=1 // loop_footer_branch
      %17 = sbr.rel target = $region3
    $region8: #{_mlp_pallas_call.1} parent=1 // loop_exit
      _
    %1201 = vsyncpa [#allocation3], 1
    %s1202 = scalar_lea.sflag [#allocation3], 1
    %1203 = vsyncpa %s1202, 1
    %1204 = vsyncpa [#allocation6], 1
    %1205 = vsyncpa [#allocation4], 1
    %s1206 = scalar_lea.sflag [#allocation4], 1
    %1207 = vsyncpa %s1206, 1

</llo_original>
